<compile_context>
chip_gen: v6e
topology: v6e:2x2x1
jax: 0.10.0
libtpu: 0.0.40
codegen_flags: <defaults>
</compile_context>

<pallas_src>
import jax
import jax.numpy as jnp
from jax import lax
from jax.experimental import pallas as pl
from jax.experimental.pallas import tpu as pltpu

# ----------------------------- configuration --------------------------------
B = 2              # batch (small, per instructions)
S_PROMPT = 8       # prompt length
MAX_NEW = 50       # matches max_new_tokens=50 in the reference forward
T_MAX = 128        # KV-cache length, padded to a full lane width
OUT_PAD = 128      # generated-token output buffer (lane-dense, >= MAX_NEW)
D = 128            # hidden size (one lane-width)
F = 256            # MLP hidden
VOCAB = 256        # vocab size

QSCALE = 1.0       # QuantStub affine params (quint8: scale=1.0, zero_point=0)
QZP = 0.0
NEG_INF = -1e30
INV_SQRT_D = 1.0 / (D ** 0.5)


# ----------------------------- fused decode kernel ---------------------------
def _generate_kernel(prompt_ref, last_ref, mask_ref, emb_ref,
                     wqkv_ref, wo_ref, w1_ref, w2_ref, wlm_ref,
                     out_ref,
                     k_cache, v_cache, x_cur):
    """Single invocation (grid=(1,)): prefill once, then an in-kernel 50-step
    greedy decode loop carrying state in VMEM scratch."""

    # ---- one-time init + prompt prefill -------------------------------------
    out_ref[...] = jnp.zeros_like(out_ref)
    k_cache[...] = jnp.zeros_like(k_cache)   # V must be initialized (p*garbage)
    v_cache[...] = jnp.zeros_like(v_cache)

    w_kv = wqkv_ref[...][:, D:]                              # [D, 2D] bf16
    xpb = prompt_ref[...].astype(jnp.bfloat16)               # [B*S, D]
    kvp = jnp.dot(xpb, w_kv, preferred_element_type=jnp.float32)   # [B*S, 2D]
    for b in range(B):                                        # static unroll, B=2
        k_cache[b, 0:S_PROMPT, :] = kvp[b * S_PROMPT:(b + 1) * S_PROMPT, :D]
        v_cache[b, 0:S_PROMPT, :] = kvp[b * S_PROMPT:(b + 1) * S_PROMPT, D:]
    x_cur[...] = last_ref[...]                                # last prompt emb

    # ---- hoisted loop-invariant constants (no per-step re-broadcast) --------
    mask_bias = mask_ref[...]                                          # [B,1,T]
    idx = lax.broadcasted_iota(jnp.int32, (B, 1, T_MAX), 2)            # causal
    vidx = lax.broadcasted_iota(jnp.int32, (B, VOCAB), 1)              # argmax
    col = lax.broadcasted_iota(jnp.int32, (B, OUT_PAD), 1)             # out col

    # ---- greedy decode loop (one scf.for, state in VMEM scratch) ------------
    @pl.loop(0, MAX_NEW)
    def _decode(t):
        pos = t + (S_PROMPT - 1)        # sequence position of the current query

        x = x_cur[...]                                          # [B, D] f32
        xb = x.astype(jnp.bfloat16)

        # fused QKV projection: one [B,128]x[128,384] bf16 matmul
        qkv = jnp.dot(xb, wqkv_ref[...],
                      preferred_element_type=jnp.float32)       # [B, 3D]
        q = qkv[:, :D]                  # 1/sqrt(D) already folded into wq
        k_new = qkv[:, D:2 * D]
        v_new = qkv[:, 2 * D:]
        k_cache[:, pl.ds(pos, 1), :] = k_new[:, None, :]
        v_cache[:, pl.ds(pos, 1), :] = v_new[:, None, :]

        # attention over the VMEM-resident cache (bf16 MXU inputs, f32 acc)
        q3 = q[:, None, :].astype(jnp.bfloat16)                 # [B,1,D]
        kb = k_cache[...].astype(jnp.bfloat16)                  # [B,T,D]
        vb = v_cache[...].astype(jnp.bfloat16)                  # [B,T,D]

        scores = jnp.einsum('bqd,bkd->bqk', q3, kb,
                            preferred_element_type=jnp.float32)  # [B,1,T]
        scores = scores + mask_bias                 # prompt-padding bias
        scores = jnp.where(idx <= pos, scores, NEG_INF)          # causal mask

        # softmax kept in f32 (v5e has no bf16 VPU/EUP)
        m = jnp.max(scores, axis=-1, keepdims=True)
        p = jnp.exp(scores - m)
        l = jnp.sum(p, axis=-1, keepdims=True)
        attn = jnp.einsum('bqk,bkd->bqd', p.astype(jnp.bfloat16), vb,
                          preferred_element_type=jnp.float32)    # [B,1,D]
        attn = (attn * pl.reciprocal(l, approx=True))[:, 0, :]   # [B, D]

        # residual + MLP + lm_head
        h = x + jnp.dot(attn.astype(jnp.bfloat16), wo_ref[...],
                        preferred_element_type=jnp.float32)
        hid = jnp.maximum(
            jnp.dot(h.astype(jnp.bfloat16), w1_ref[...],
                    preferred_element_type=jnp.float32), 0.0)    # [B, F]
        h = h + jnp.dot(hid.astype(jnp.bfloat16), w2_ref[...],
                        preferred_element_type=jnp.float32)
        logits = jnp.dot(h.astype(jnp.bfloat16), wlm_ref[...],
                         preferred_element_type=jnp.float32)     # [B, V]

        # greedy argmax (first max index); kept as max/where/min for robust
        # Mosaic lowering of the cross-lane arg-reduction.
        mx = jnp.max(logits, axis=-1, keepdims=True)
        cand = jnp.where(logits >= mx, vidx.astype(jnp.float32), float(VOCAB))
        tok = jnp.min(cand, axis=-1, keepdims=True).astype(jnp.int32)  # [B, 1]

        # write token into output column t (vector select, lane-dense store)
        out_ref[...] = jnp.where(col == t, tok, out_ref[...])

        # embed the chosen token for the next step (one-hot @ emb in bf16)
        onehot = (vidx == tok).astype(jnp.bfloat16)              # [B, V]
        x_cur[...] = jnp.dot(onehot, emb_ref[...],
                             preferred_element_type=jnp.float32) # [B, D]


def _const_spec(shape):
    zeros = (0,) * len(shape)
    return pl.BlockSpec(shape, lambda t, _z=zeros: _z)


# ----------------------------- forward ---------------------------------------
@jax.jit
def quantized_model_forward(input_ids, attention_mask,
                            emb, wq, wk, wv, wo, w1, w2, wlm):
    # ---- QuantStub: affine quint8 fake-quant round trip (plain jnp) ----
    ids_f = input_ids.astype(jnp.float32)
    qv = jnp.clip(jnp.round(ids_f / QSCALE) + QZP, 0.0, 255.0)
    ids_f = (qv - QZP) * QSCALE
    ids = jnp.clip(jnp.round(ids_f), 0, VOCAB - 1).astype(jnp.int32)

    # ---- prompt embeddings (one-time prefill inputs) ----
    prompt_emb = jnp.take(emb, ids, axis=0)                   # [B, S, D] f32
    prompt_emb2d = prompt_emb.reshape(B * S_PROMPT, D)
    last_emb = prompt_emb[:, S_PROMPT - 1, :]                 # [B, D]

    # additive attention-mask bias: -inf on prompt padding, 0 elsewhere
    pos_idx = jnp.arange(T_MAX)[None, :]
    padded_mask = jnp.pad(attention_mask, ((0, 0), (0, T_MAX - S_PROMPT)),
                          constant_values=1)
    mask_bias = jnp.where((pos_idx < S_PROMPT) & (padded_mask == 0),
                          NEG_INF, 0.0).astype(jnp.float32)[:, None, :]

    # bf16 weights (f32 accumulation in-kernel); fold 1/sqrt(D) into wq and
    # fuse Q/K/V into a single [D, 3D] matrix.
    wqkv_b = jnp.concatenate([wq * INV_SQRT_D, wk, wv], axis=1).astype(jnp.bfloat16)
    wo_b = wo.astype(jnp.bfloat16)
    w1_b = w1.astype(jnp.bfloat16)
    w2_b = w2.astype(jnp.bfloat16)
    wlm_b = wlm.astype(jnp.bfloat16)
    emb_b = emb.astype(jnp.bfloat16)          # one-hot lookup is exact in bf16

    # ---- ONE fused pallas_call: grid=(1,), 50-step loop lives in-kernel ----
    gen = pl.pallas_call(
        _generate_kernel,
        grid=(1,),
        in_specs=[
            _const_spec((B * S_PROMPT, D)),   # prompt embeddings
            _const_spec((B, D)),              # last prompt embedding
            _const_spec((B, 1, T_MAX)),       # attention-mask bias
            _const_spec((VOCAB, D)),          # embedding table (bf16)
            _const_spec((D, 3 * D)),          # fused wqkv
            _const_spec((D, D)),              # wo
            _const_spec((D, F)),              # w1
            _const_spec((F, D)),              # w2
            _const_spec((D, VOCAB)),          # wlm
        ],
        out_specs=pl.BlockSpec((B, OUT_PAD), lambda t: (0, 0)),
        out_shape=jax.ShapeDtypeStruct((B, OUT_PAD), jnp.int32),
        scratch_shapes=[
            pltpu.VMEM((B, T_MAX, D), jnp.float32),   # K cache
            pltpu.VMEM((B, T_MAX, D), jnp.float32),   # V cache
            pltpu.VMEM((B, D), jnp.float32),          # current token embedding
        ],
        compiler_params=pltpu.CompilerParams(
            dimension_semantics=("arbitrary",)),
    )(prompt_emb2d, last_emb, mask_bias, emb_b,
      wqkv_b, wo_b, w1_b, w2_b, wlm_b)

    new_tokens = gen[:, :MAX_NEW]                              # [B, MAX_NEW]
    sequences = jnp.concatenate([ids, new_tokens], axis=1)     # [B, S+MAX_NEW]

    # ---- DeQuantStub: int tokens -> float (plain jnp) ----
    return sequences.astype(jnp.float32) * QSCALE


# ----------------------------- main ------------------------------------------
if __name__ == "__main__":
    key = jax.random.PRNGKey(0)
    k_ids, k_emb, k_q, k_k, k_v, k_o, k_1, k_2, k_lm = jax.random.split(key, 9)

    input_ids = jax.random.randint(k_ids, (B, S_PROMPT), 0, VOCAB, dtype=jnp.int32)
    attention_mask = jnp.ones((B, S_PROMPT), jnp.int32)

    scale = 0.02
    emb = jax.random.normal(k_emb, (VOCAB, D), jnp.float32) * scale
    wq = jax.random.normal(k_q, (D, D), jnp.float32) * scale
    wk = jax.random.normal(k_k, (D, D), jnp.float32) * scale
    wv = jax.random.normal(k_v, (D, D), jnp.float32) * scale
    wo = jax.random.normal(k_o, (D, D), jnp.float32) * scale
    w1 = jax.random.normal(k_1, (D, F), jnp.float32) * scale
    w2 = jax.random.normal(k_2, (F, D), jnp.float32) * scale
    wlm = jax.random.normal(k_lm, (D, VOCAB), jnp.float32) * scale

    out = quantized_model_forward(input_ids, attention_mask,
                                  emb, wq, wk, wv, wo, w1, w2, wlm)
    out = jax.block_until_ready(out)
    assert out.shape == (B, S_PROMPT + MAX_NEW), out.shape
    assert out.dtype == jnp.float32
    print("KERNEL_OK")
</pallas_src>

<mosaic_0001>
module attributes {stable_mosaic.version = 11 : i64} {
  func.func @_generate_kernel(%arg0: i32, %arg1: memref<16x128xf32, #tpu.memory_space<vmem>>, %arg2: memref<2x128xf32, #tpu.memory_space<vmem>>, %arg3: memref<2x1x128xf32, #tpu.memory_space<vmem>>, %arg4: memref<256x128xbf16, #tpu.memory_space<vmem>>, %arg5: memref<128x384xbf16, #tpu.memory_space<vmem>>, %arg6: memref<128x128xbf16, #tpu.memory_space<vmem>>, %arg7: memref<128x256xbf16, #tpu.memory_space<vmem>>, %arg8: memref<256x128xbf16, #tpu.memory_space<vmem>>, %arg9: memref<128x256xbf16, #tpu.memory_space<vmem>>, %arg10: memref<2x128xi32, #tpu.memory_space<vmem>>, %arg11: memref<2x128x128xf32, #tpu.memory_space<vmem>>, %arg12: memref<2x128x128xf32, #tpu.memory_space<vmem>>, %arg13: memref<2x128xf32, #tpu.memory_space<vmem>>) attributes {dimension_semantics = [#tpu.dimension_semantics<arbitrary>], iteration_bounds = array<i64: 1>, scalar_prefetch = 0 : i64, scratch_operands = 3 : i64, tpu.core_type = #tpu.core_type<tc>, window_params = [{pipeline_mode = #tpu.pipeline_mode<synchronous>, transform_indices = @transform_0, window_bounds = array<i64: 16, 128>}, {pipeline_mode = #tpu.pipeline_mode<synchronous>, transform_indices = @transform_1, window_bounds = array<i64: 2, 128>}, {pipeline_mode = #tpu.pipeline_mode<synchronous>, transform_indices = @transform_2, window_bounds = array<i64: 2, 1, 128>}, {pipeline_mode = #tpu.pipeline_mode<synchronous>, transform_indices = @transform_3, window_bounds = array<i64: 256, 128>}, {pipeline_mode = #tpu.pipeline_mode<synchronous>, transform_indices = @transform_4, window_bounds = array<i64: 128, 384>}, {pipeline_mode = #tpu.pipeline_mode<synchronous>, transform_indices = @transform_5, window_bounds = array<i64: 128, 128>}, {pipeline_mode = #tpu.pipeline_mode<synchronous>, transform_indices = @transform_6, window_bounds = array<i64: 128, 256>}, {pipeline_mode = #tpu.pipeline_mode<synchronous>, transform_indices = @transform_7, window_bounds = array<i64: 256, 128>}, {pipeline_mode = #tpu.pipeline_mode<synchronous>, transform_indices = @transform_8, window_bounds = array<i64: 128, 256>}, {pipeline_mode = #tpu.pipeline_mode<synchronous>, transform_indices = @transform_9, window_bounds = array<i64: 2, 128>}]} {
    %c0_i32 = arith.constant 0 : i32
    %0 = vector.broadcast %c0_i32 : i32 to vector<2x128xi32>
    %c0 = arith.constant 0 : index
    %c0_0 = arith.constant 0 : index
    %1 = vector.load %arg10[%c0, %c0_0] : memref<2x128xi32, #tpu.memory_space<vmem>>, vector<2x128xi32>
    tpu.vector_store %arg10[%c0, %c0_0], %0 {strides = array<i32>} : memref<2x128xi32, #tpu.memory_space<vmem>>, vector<2x128xi32>,
    %cst = arith.constant 0.000000e+00 : f32
    %2 = vector.broadcast %cst : f32 to vector<2x128x128xf32>
    %c0_1 = arith.constant 0 : index
    %c0_2 = arith.constant 0 : index
    %c0_3 = arith.constant 0 : index
    %3 = vector.load %arg11[%c0_1, %c0_2, %c0_3] : memref<2x128x128xf32, #tpu.memory_space<vmem>>, vector<2x128x128xf32>
    tpu.vector_store %arg11[%c0_1, %c0_2, %c0_3], %2 {strides = array<i32>} : memref<2x128x128xf32, #tpu.memory_space<vmem>>, vector<2x128x128xf32>,
    %cst_4 = arith.constant 0.000000e+00 : f32
    %4 = vector.broadcast %cst_4 : f32 to vector<2x128x128xf32>
    %c0_5 = arith.constant 0 : index
    %c0_6 = arith.constant 0 : index
    %c0_7 = arith.constant 0 : index
    %5 = vector.load %arg12[%c0_5, %c0_6, %c0_7] : memref<2x128x128xf32, #tpu.memory_space<vmem>>, vector<2x128x128xf32>
    tpu.vector_store %arg12[%c0_5, %c0_6, %c0_7], %4 {strides = array<i32>} : memref<2x128x128xf32, #tpu.memory_space<vmem>>, vector<2x128x128xf32>,
    %c0_8 = arith.constant 0 : index
    %c0_9 = arith.constant 0 : index
    %6 = vector.load %arg5[%c0_8, %c0_9] : memref<128x384xbf16, #tpu.memory_space<vmem>>, vector<128x384xbf16>
    %7 = vector.extract_strided_slice %6 {offsets = [0, 128], sizes = [128, 256], strides = [1, 1]} : vector<128x384xbf16> to vector<128x256xbf16>
    %c0_10 = arith.constant 0 : index
    %c0_11 = arith.constant 0 : index
    %8 = vector.load %arg1[%c0_10, %c0_11] : memref<16x128xf32, #tpu.memory_space<vmem>>, vector<16x128xf32>
    %9 = arith.truncf %8 : vector<16x128xf32> to vector<16x128xbf16>
    %cst_12 = arith.constant dense<0.000000e+00> : vector<16x256xf32>
    %10 = tpu.matmul %9, %7, %cst_12 {dimension_numbers = #tpu.dot_dimension_numbers<[1], [0], [0], [1], [0, 0, 1, 1], [], []>} : vector<16x128xbf16>, vector<128x256xbf16>, vector<16x256xf32> -> vector<16x256xf32>
    %11 = vector.extract_strided_slice %10 {offsets = [0, 0], sizes = [8, 128], strides = [1, 1]} : vector<16x256xf32> to vector<8x128xf32>
    %c0_13 = arith.constant 0 : index
    %c0_14 = arith.constant 0 : index
    %c0_15 = arith.constant 0 : index
    %12 = vector.load %arg11[%c0_13, %c0_14, %c0_15] : memref<2x128x128xf32, #tpu.memory_space<vmem>>, vector<1x8x128xf32>
    %13 = vector.shape_cast %12 : vector<1x8x128xf32> to vector<8x128xf32>
    %14 = vector.shape_cast %11 : vector<8x128xf32> to vector<1x8x128xf32>
    tpu.vector_store %arg11[%c0_13, %c0_14, %c0_15], %14 {strides = array<i32>} : memref<2x128x128xf32, #tpu.memory_space<vmem>>, vector<1x8x128xf32>,
    %15 = vector.extract_strided_slice %10 {offsets = [0, 128], sizes = [8, 128], strides = [1, 1]} : vector<16x256xf32> to vector<8x128xf32>
    %c0_16 = arith.constant 0 : index
    %c0_17 = arith.constant 0 : index
    %c0_18 = arith.constant 0 : index
    %16 = vector.load %arg12[%c0_16, %c0_17, %c0_18] : memref<2x128x128xf32, #tpu.memory_space<vmem>>, vector<1x8x128xf32>
    %17 = vector.shape_cast %16 : vector<1x8x128xf32> to vector<8x128xf32>
    %18 = vector.shape_cast %15 : vector<8x128xf32> to vector<1x8x128xf32>
    tpu.vector_store %arg12[%c0_16, %c0_17, %c0_18], %18 {strides = array<i32>} : memref<2x128x128xf32, #tpu.memory_space<vmem>>, vector<1x8x128xf32>,
    %19 = vector.extract_strided_slice %10 {offsets = [8, 0], sizes = [8, 128], strides = [1, 1]} : vector<16x256xf32> to vector<8x128xf32>
    %c1 = arith.constant 1 : index
    %c0_19 = arith.constant 0 : index
    %c0_20 = arith.constant 0 : index
    %20 = vector.load %arg11[%c1, %c0_19, %c0_20] : memref<2x128x128xf32, #tpu.memory_space<vmem>>, vector<1x8x128xf32>
    %21 = vector.shape_cast %20 : vector<1x8x128xf32> to vector<8x128xf32>
    %22 = vector.shape_cast %19 : vector<8x128xf32> to vector<1x8x128xf32>
    tpu.vector_store %arg11[%c1, %c0_19, %c0_20], %22 {strides = array<i32>} : memref<2x128x128xf32, #tpu.memory_space<vmem>>, vector<1x8x128xf32>,
    %23 = vector.extract_strided_slice %10 {offsets = [8, 128], sizes = [8, 128], strides = [1, 1]} : vector<16x256xf32> to vector<8x128xf32>
    %c1_21 = arith.constant 1 : index
    %c0_22 = arith.constant 0 : index
    %c0_23 = arith.constant 0 : index
    %24 = vector.load %arg12[%c1_21, %c0_22, %c0_23] : memref<2x128x128xf32, #tpu.memory_space<vmem>>, vector<1x8x128xf32>
    %25 = vector.shape_cast %24 : vector<1x8x128xf32> to vector<8x128xf32>
    %26 = vector.shape_cast %23 : vector<8x128xf32> to vector<1x8x128xf32>
    tpu.vector_store %arg12[%c1_21, %c0_22, %c0_23], %26 {strides = array<i32>} : memref<2x128x128xf32, #tpu.memory_space<vmem>>, vector<1x8x128xf32>,
    %c0_24 = arith.constant 0 : index
    %c0_25 = arith.constant 0 : index
    %27 = vector.load %arg2[%c0_24, %c0_25] : memref<2x128xf32, #tpu.memory_space<vmem>>, vector<2x128xf32>
    %c0_26 = arith.constant 0 : index
    %c0_27 = arith.constant 0 : index
    %28 = vector.load %arg13[%c0_26, %c0_27] : memref<2x128xf32, #tpu.memory_space<vmem>>, vector<2x128xf32>
    tpu.vector_store %arg13[%c0_26, %c0_27], %27 {strides = array<i32>} : memref<2x128xf32, #tpu.memory_space<vmem>>, vector<2x128xf32>,
    %c0_28 = arith.constant 0 : index
    %c0_29 = arith.constant 0 : index
    %c0_30 = arith.constant 0 : index
    %29 = vector.load %arg3[%c0_28, %c0_29, %c0_30] : memref<2x1x128xf32, #tpu.memory_space<vmem>>, vector<2x1x128xf32>
    %30 = tpu.iota {dimensions = array<i32: 2>} : vector<2x1x128xi32>
    %31 = tpu.iota {dimensions = array<i32: 1>} : vector<2x256xi32>
    %32 = tpu.iota {dimensions = array<i32: 1>} : vector<2x128xi32>
    %c0_i32_31 = arith.constant 0 : i32
    %c50_i32 = arith.constant 50 : i32
    %33 = arith.addi %c0_i32_31, %c50_i32 : i32
    %c1_i32 = arith.constant 1 : i32
    scf.for %arg14 = %c0_i32_31 to %33 step %c1_i32  : i32 {
      %c1_i32_33 = arith.constant 1 : i32
      %34 = arith.muli %arg14, %c1_i32_33 : i32
      %c0_i32_34 = arith.constant 0 : i32
      %35 = arith.addi %c0_i32_34, %34 : i32
      %c7_i32 = arith.constant 7 : i32
      %36 = arith.addi %35, %c7_i32 : i32
      %c0_35 = arith.constant 0 : index
      %c0_36 = arith.constant 0 : index
      %37 = vector.load %arg13[%c0_35, %c0_36] : memref<2x128xf32, #tpu.memory_space<vmem>>, vector<2x128xf32>
      %38 = arith.truncf %37 : vector<2x128xf32> to vector<2x128xbf16>
      %c0_37 = arith.constant 0 : index
      %c0_38 = arith.constant 0 : index
      %39 = vector.load %arg5[%c0_37, %c0_38] : memref<128x384xbf16, #tpu.memory_space<vmem>>, vector<128x384xbf16>
      %cst_39 = arith.constant dense<0.000000e+00> : vector<2x384xf32>
      %40 = tpu.matmul %38, %39, %cst_39 {dimension_numbers = #tpu.dot_dimension_numbers<[1], [0], [0], [1], [0, 0, 1, 1], [], []>} : vector<2x128xbf16>, vector<128x384xbf16>, vector<2x384xf32> -> vector<2x384xf32>
      %41 = vector.extract_strided_slice %40 {offsets = [0, 0], sizes = [2, 128], strides = [1, 1]} : vector<2x384xf32> to vector<2x128xf32>
      %42 = vector.extract_strided_slice %40 {offsets = [0, 128], sizes = [2, 128], strides = [1, 1]} : vector<2x384xf32> to vector<2x128xf32>
      %43 = vector.extract_strided_slice %40 {offsets = [0, 256], sizes = [2, 128], strides = [1, 1]} : vector<2x384xf32> to vector<2x128xf32>
      %44 = vector.shape_cast %42 : vector<2x128xf32> to vector<2x1x128xf32>
      %c0_40 = arith.constant 0 : index
      %45 = arith.index_cast %36 : i32 to index
      %c0_41 = arith.constant 0 : index
      %46 = vector.load %arg11[%c0_40, %45, %c0_41] : memref<2x128x128xf32, #tpu.memory_space<vmem>>, vector<2x1x128xf32>
      tpu.vector_store %arg11[%c0_40, %45, %c0_41], %44 {strides = array<i32>} : memref<2x128x128xf32, #tpu.memory_space<vmem>>, vector<2x1x128xf32>,
      %47 = vector.shape_cast %43 : vector<2x128xf32> to vector<2x1x128xf32>
      %c0_42 = arith.constant 0 : index
      %48 = arith.index_cast %36 : i32 to index
      %c0_43 = arith.constant 0 : index
      %49 = vector.load %arg12[%c0_42, %48, %c0_43] : memref<2x128x128xf32, #tpu.memory_space<vmem>>, vector<2x1x128xf32>
      tpu.vector_store %arg12[%c0_42, %48, %c0_43], %47 {strides = array<i32>} : memref<2x128x128xf32, #tpu.memory_space<vmem>>, vector<2x1x128xf32>,
      %50 = vector.shape_cast %41 : vector<2x128xf32> to vector<2x1x128xf32>
      %51 = arith.truncf %50 : vector<2x1x128xf32> to vector<2x1x128xbf16>
      %c0_44 = arith.constant 0 : index
      %c0_45 = arith.constant 0 : index
      %c0_46 = arith.constant 0 : index
      %52 = vector.load %arg11[%c0_44, %c0_45, %c0_46] : memref<2x128x128xf32, #tpu.memory_space<vmem>>, vector<2x128x128xf32>
      %53 = arith.truncf %52 : vector<2x128x128xf32> to vector<2x128x128xbf16>
      %c0_47 = arith.constant 0 : index
      %c0_48 = arith.constant 0 : index
      %c0_49 = arith.constant 0 : index
      %54 = vector.load %arg12[%c0_47, %c0_48, %c0_49] : memref<2x128x128xf32, #tpu.memory_space<vmem>>, vector<2x128x128xf32>
      %55 = arith.truncf %54 : vector<2x128x128xf32> to vector<2x128x128xbf16>
      "tpu.trace_start"() <{level = 10 : i32, message = "bqd,bkd->bqk"}> : () -> ()
      %cst_50 = arith.constant dense<0.000000e+00> : vector<2x1x128xf32>
      %56 = tpu.matmul %51, %53, %cst_50 {dimension_numbers = #tpu.dot_dimension_numbers<[2], [2], [1], [1], [0, 0, 0, 1, 1, 1], [0], [0]>} : vector<2x1x128xbf16>, vector<2x128x128xbf16>, vector<2x1x128xf32> -> vector<2x1x128xf32>
      "tpu.trace_stop"() : () -> ()
      %57 = arith.addf %56, %29 : vector<2x1x128xf32>
      %58 = vector.broadcast %36 : i32 to vector<2x1x128xi32>
      %59 = arith.cmpi sle, %30, %58 : vector<2x1x128xi32>
      %cst_51 = arith.constant -1.000000e+30 : f32
      %60 = vector.broadcast %cst_51 : f32 to vector<2x1x128xf32>
      %61 = arith.select %59, %57, %60 : vector<2x1x128xi1>, vector<2x1x128xf32>
      %cst_52 = arith.constant dense<0xFF800000> : vector<2x1xf32>
      %62 = vector.multi_reduction <maximumf>, %61, %cst_52 [2] : vector<2x1x128xf32> to vector<2x1xf32>
      %63 = vector.shape_cast %62 : vector<2x1xf32> to vector<2x1x1xf32>
      %64 = vector.broadcast %63 : vector<2x1x1xf32> to vector<2x1x128xf32>
      %65 = arith.subf %61, %64 : vector<2x1x128xf32>
      %66 = math.exp %65 : vector<2x1x128xf32>
      %cst_53 = arith.constant dense<0.000000e+00> : vector<2x1xf32>
      %67 = vector.multi_reduction <add>, %66, %cst_53 [2] : vector<2x1x128xf32> to vector<2x1xf32>
      %68 = vector.shape_cast %67 : vector<2x1xf32> to vector<2x1x1xf32>
      %69 = arith.truncf %66 : vector<2x1x128xf32> to vector<2x1x128xbf16>
      "tpu.trace_start"() <{level = 10 : i32, message = "bqk,bkd->bqd"}> : () -> ()
      %cst_54 = arith.constant dense<0.000000e+00> : vector<2x1x128xf32>
      %70 = tpu.matmul %69, %55, %cst_54 {dimension_numbers = #tpu.dot_dimension_numbers<[2], [1], [1], [2], [0, 0, 0, 1, 1, 2], [0], [0]>} : vector<2x1x128xbf16>, vector<2x128x128xbf16>, vector<2x1x128xf32> -> vector<2x1x128xf32>
      "tpu.trace_stop"() : () -> ()
      %71 = tpu.reciprocal %68 {approx = true} : vector<2x1x1xf32> -> vector<2x1x1xf32>
      %72 = vector.broadcast %71 : vector<2x1x1xf32> to vector<2x1x128xf32>
      %73 = arith.mulf %70, %72 : vector<2x1x128xf32>
      %74 = vector.shape_cast %73 : vector<2x1x128xf32> to vector<2x128xf32>
      %75 = arith.truncf %74 : vector<2x128xf32> to vector<2x128xbf16>
      %c0_55 = arith.constant 0 : index
      %c0_56 = arith.constant 0 : index
      %76 = vector.load %arg6[%c0_55, %c0_56] : memref<128x128xbf16, #tpu.memory_space<vmem>>, vector<128x128xbf16>
      %cst_57 = arith.constant dense<0.000000e+00> : vector<2x128xf32>
      %77 = tpu.matmul %75, %76, %cst_57 {dimension_numbers = #tpu.dot_dimension_numbers<[1], [0], [0], [1], [0, 0, 1, 1], [], []>} : vector<2x128xbf16>, vector<128x128xbf16>, vector<2x128xf32> -> vector<2x128xf32>
      %78 = arith.addf %37, %77 : vector<2x128xf32>
      %79 = arith.truncf %78 : vector<2x128xf32> to vector<2x128xbf16>
      %c0_58 = arith.constant 0 : index
      %c0_59 = arith.constant 0 : index
      %80 = vector.load %arg7[%c0_58, %c0_59] : memref<128x256xbf16, #tpu.memory_space<vmem>>, vector<128x256xbf16>
      %cst_60 = arith.constant dense<0.000000e+00> : vector<2x256xf32>
      %81 = tpu.matmul %79, %80, %cst_60 {dimension_numbers = #tpu.dot_dimension_numbers<[1], [0], [0], [1], [0, 0, 1, 1], [], []>} : vector<2x128xbf16>, vector<128x256xbf16>, vector<2x256xf32> -> vector<2x256xf32>
      %cst_61 = arith.constant 0.000000e+00 : f32
      %82 = vector.broadcast %cst_61 : f32 to vector<2x256xf32>
      %83 = arith.maximumf %81, %82 : vector<2x256xf32>
      %84 = arith.truncf %83 : vector<2x256xf32> to vector<2x256xbf16>
      %c0_62 = arith.constant 0 : index
      %c0_63 = arith.constant 0 : index
      %85 = vector.load %arg8[%c0_62, %c0_63] : memref<256x128xbf16, #tpu.memory_space<vmem>>, vector<256x128xbf16>
      %cst_64 = arith.constant dense<0.000000e+00> : vector<2x128xf32>
      %86 = tpu.matmul %84, %85, %cst_64 {dimension_numbers = #tpu.dot_dimension_numbers<[1], [0], [0], [1], [0, 0, 1, 1], [], []>} : vector<2x256xbf16>, vector<256x128xbf16>, vector<2x128xf32> -> vector<2x128xf32>
      %87 = arith.addf %78, %86 : vector<2x128xf32>
      %88 = arith.truncf %87 : vector<2x128xf32> to vector<2x128xbf16>
      %c0_65 = arith.constant 0 : index
      %c0_66 = arith.constant 0 : index
      %89 = vector.load %arg9[%c0_65, %c0_66] : memref<128x256xbf16, #tpu.memory_space<vmem>>, vector<128x256xbf16>
      %cst_67 = arith.constant dense<0.000000e+00> : vector<2x256xf32>
      %90 = tpu.matmul %88, %89, %cst_67 {dimension_numbers = #tpu.dot_dimension_numbers<[1], [0], [0], [1], [0, 0, 1, 1], [], []>} : vector<2x128xbf16>, vector<128x256xbf16>, vector<2x256xf32> -> vector<2x256xf32>
      %cst_68 = arith.constant dense<0xFF800000> : vector<2xf32>
      %91 = vector.multi_reduction <maximumf>, %90, %cst_68 [1] : vector<2x256xf32> to vector<2xf32>
      %92 = vector.shape_cast %91 : vector<2xf32> to vector<2x1xf32>
      %93 = vector.broadcast %92 : vector<2x1xf32> to vector<2x256xf32>
      %94 = arith.cmpf oge, %90, %93 : vector<2x256xf32>
      %95 = arith.sitofp %31 : vector<2x256xi32> to vector<2x256xf32>
      %cst_69 = arith.constant 2.560000e+02 : f32
      %96 = vector.broadcast %cst_69 : f32 to vector<2x256xf32>
      %97 = arith.select %94, %95, %96 : vector<2x256xi1>, vector<2x256xf32>
      %cst_70 = arith.constant dense<0x7F800000> : vector<2xf32>
      %98 = vector.multi_reduction <minimumf>, %97, %cst_70 [1] : vector<2x256xf32> to vector<2xf32>
      %99 = vector.shape_cast %98 : vector<2xf32> to vector<2x1xf32>
      %100 = arith.fptosi %99 : vector<2x1xf32> to vector<2x1xi32>
      %101 = vector.broadcast %35 : i32 to vector<2x128xi32>
      %102 = arith.cmpi eq, %32, %101 : vector<2x128xi32>
      %c0_71 = arith.constant 0 : index
      %c0_72 = arith.constant 0 : index
      %103 = vector.load %arg10[%c0_71, %c0_72] : memref<2x128xi32, #tpu.memory_space<vmem>>, vector<2x128xi32>
      %104 = vector.shape_cast %100 : vector<2x1xi32> to vector<2x1xi32>
      %105 = vector.broadcast %104 : vector<2x1xi32> to vector<2x128xi32>
      %106 = arith.select %102, %105, %103 : vector<2x128xi1>, vector<2x128xi32>
      %c0_73 = arith.constant 0 : index
      %c0_74 = arith.constant 0 : index
      %107 = vector.load %arg10[%c0_73, %c0_74] : memref<2x128xi32, #tpu.memory_space<vmem>>, vector<2x128xi32>
      tpu.vector_store %arg10[%c0_73, %c0_74], %106 {strides = array<i32>} : memref<2x128xi32, #tpu.memory_space<vmem>>, vector<2x128xi32>,
      %108 = vector.broadcast %100 : vector<2x1xi32> to vector<2x256xi32>
      %109 = arith.cmpi eq, %31, %108 : vector<2x256xi32>
      %110 = arith.extui %109 : vector<2x256xi1> to vector<2x256xi32>
      %111 = arith.sitofp %110 : vector<2x256xi32> to vector<2x256xf32>
      %112 = arith.truncf %111 : vector<2x256xf32> to vector<2x256xbf16>
      %c0_75 = arith.constant 0 : index
      %c0_76 = arith.constant 0 : index
      %113 = vector.load %arg4[%c0_75, %c0_76] : memref<256x128xbf16, #tpu.memory_space<vmem>>, vector<256x128xbf16>
      %cst_77 = arith.constant dense<0.000000e+00> : vector<2x128xf32>
      %114 = tpu.matmul %112, %113, %cst_77 {dimension_numbers = #tpu.dot_dimension_numbers<[1], [0], [0], [1], [0, 0, 1, 1], [], []>} : vector<2x256xbf16>, vector<256x128xbf16>, vector<2x128xf32> -> vector<2x128xf32>
      %c0_78 = arith.constant 0 : index
      %c0_79 = arith.constant 0 : index
      %115 = vector.load %arg13[%c0_78, %c0_79] : memref<2x128xf32, #tpu.memory_space<vmem>>, vector<2x128xf32>
      tpu.vector_store %arg13[%c0_78, %c0_79], %114 {strides = array<i32>} : memref<2x128xf32, #tpu.memory_space<vmem>>, vector<2x128xf32>,
    }
    %c50_i32_32 = arith.constant 50 : i32
    return
  }
  func.func @transform_0(%arg0: i32) -> (i32, i32) {
    %c0_i32 = arith.constant 0 : i32
    %c0_i32_0 = arith.constant 0 : i32
    %c0_i32_1 = arith.constant 0 : i32
    return %c0_i32, %c0_i32_0 : i32, i32
  }
  func.func @transform_1(%arg0: i32) -> (i32, i32) {
    %c0_i32 = arith.constant 0 : i32
    %c0_i32_0 = arith.constant 0 : i32
    %c0_i32_1 = arith.constant 0 : i32
    return %c0_i32, %c0_i32_0 : i32, i32
  }
  func.func @transform_2(%arg0: i32) -> (i32, i32, i32) {
    %c0_i32 = arith.constant 0 : i32
    %c0_i32_0 = arith.constant 0 : i32
    %c0_i32_1 = arith.constant 0 : i32
    %c0_i32_2 = arith.constant 0 : i32
    return %c0_i32, %c0_i32_0, %c0_i32_1 : i32, i32, i32
  }
  func.func @transform_3(%arg0: i32) -> (i32, i32) {
    %c0_i32 = arith.constant 0 : i32
    %c0_i32_0 = arith.constant 0 : i32
    %c0_i32_1 = arith.constant 0 : i32
    return %c0_i32, %c0_i32_0 : i32, i32
  }
  func.func @transform_4(%arg0: i32) -> (i32, i32) {
    %c0_i32 = arith.constant 0 : i32
    %c0_i32_0 = arith.constant 0 : i32
    %c0_i32_1 = arith.constant 0 : i32
    return %c0_i32, %c0_i32_0 : i32, i32
  }
  func.func @transform_5(%arg0: i32) -> (i32, i32) {
    %c0_i32 = arith.constant 0 : i32
    %c0_i32_0 = arith.constant 0 : i32
    %c0_i32_1 = arith.constant 0 : i32
    return %c0_i32, %c0_i32_0 : i32, i32
  }
  func.func @transform_6(%arg0: i32) -> (i32, i32) {
    %c0_i32 = arith.constant 0 : i32
    %c0_i32_0 = arith.constant 0 : i32
    %c0_i32_1 = arith.constant 0 : i32
    return %c0_i32, %c0_i32_0 : i32, i32
  }
  func.func @transform_7(%arg0: i32) -> (i32, i32) {
    %c0_i32 = arith.constant 0 : i32
    %c0_i32_0 = arith.constant 0 : i32
    %c0_i32_1 = arith.constant 0 : i32
    return %c0_i32, %c0_i32_0 : i32, i32
  }
  func.func @transform_8(%arg0: i32) -> (i32, i32) {
    %c0_i32 = arith.constant 0 : i32
    %c0_i32_0 = arith.constant 0 : i32
    %c0_i32_1 = arith.constant 0 : i32
    return %c0_i32, %c0_i32_0 : i32, i32
  }
  func.func @transform_9(%arg0: i32) -> (i32, i32) {
    %c0_i32 = arith.constant 0 : i32
    %c0_i32_0 = arith.constant 0 : i32
    %c0_i32_1 = arith.constant 0 : i32
    return %c0_i32, %c0_i32_0 : i32, i32
  }
}

</mosaic_0001>

<llo_original>
// kernel: quantized_model_forward.1
$region0: #{quantized_model_forward.1}
  #allocation0 [shape = 'u32[]', space=smem, size = 0x4, offset = 0x4, fixed_abs, tag = 'smem constant byte address 0x4 - core index']
  #allocation1 [shape = 'u32[144,128]{1,0:T(1,128)}', space=vmem, size = 0x12000, scoped, tag = 'internal scratch']
  #allocation2 [shape = 'f32[2,128,128]{2,1,0:T(8,128)}', space=vmem, size = 0x20000, scoped, tag = 'scratch operand']
  #allocation3 [shape = 'f32[2,128,128]{2,1,0:T(8,128)}', space=vmem, size = 0x20000, scoped, tag = 'scratch operand']
  #allocation4 [shape = 'f32[2,128]{1,0:T(2,128)}', space=vmem, size = 0x400, scoped, tag = 'scratch operand']
  %s0 = inlined_call_operand.vmem [shape: f32[16,128], index: 0, kind: input, shape index: {}]
  %s1 = inlined_call_operand.vmem [shape: f32[2,128], index: 1, kind: input, shape index: {}]
  %s2 = inlined_call_operand.vmem [shape: f32[2,1,128], index: 2, kind: input, shape index: {}]
  %s3 = inlined_call_operand.vmem [shape: bf16[256,128], index: 3, kind: input, shape index: {}]
  %s4 = inlined_call_operand.vmem [shape: bf16[128,384], index: 4, kind: input, shape index: {}]
  %s5 = inlined_call_operand.vmem [shape: bf16[128,128], index: 5, kind: input, shape index: {}]
  %s6 = inlined_call_operand.vmem [shape: bf16[128,256], index: 6, kind: input, shape index: {}]
  %s7 = inlined_call_operand.vmem [shape: bf16[256,128], index: 7, kind: input, shape index: {}]
  %s8 = inlined_call_operand.vmem [shape: bf16[128,256], index: 8, kind: input, shape index: {}]
  %s9 = inlined_call_operand.vmem [shape: s32[2,128], index: 9, kind: output, shape index: {}]
  %s10 = sld [smem:[#allocation0]]
  $region53: #{quantized_model_forward.1} parent=0
    _
  %s12 = ssub.s32 1, %s10
  %s13 = scalar_select 0, %s12, %s10
  // Predicated region
  $region2: #{quantized_model_forward.1} parent=0 // pred_check
    _
  $region3: #{quantized_model_forward.1} parent=0 // pred_check_branch
    %15 = sbr.rel (0) target = $region5
  $region4: #{quantized_model_forward.1} parent=0 // pred_region
    _
  $region5: #{quantized_model_forward.1} parent=0 // pred_fallthru
    _
  // Predicated region
  $region6: #{quantized_model_forward.1} parent=0 // pred_check
    _
  $region7: #{quantized_model_forward.1} parent=0 // pred_check_branch
    %17 = sbr.rel (0) target = $region9
  $region8: #{quantized_model_forward.1} parent=0 // pred_region
    _
  $region9: #{quantized_model_forward.1} parent=0 // pred_fallthru
    _
  // Predicated region
  $region10: #{quantized_model_forward.1} parent=0 // pred_check
    _
  $region11: #{quantized_model_forward.1} parent=0 // pred_check_branch
    %19 = sbr.rel (0) target = $region13
  $region12: #{quantized_model_forward.1} parent=0 // pred_region
    _
  $region13: #{quantized_model_forward.1} parent=0 // pred_fallthru
    _
  // Predicated region
  $region14: #{quantized_model_forward.1} parent=0 // pred_check
    _
  $region15: #{quantized_model_forward.1} parent=0 // pred_check_branch
    %21 = sbr.rel (0) target = $region17
  $region16: #{quantized_model_forward.1} parent=0 // pred_region
    _
  $region17: #{quantized_model_forward.1} parent=0 // pred_fallthru
    _
  // Predicated region
  $region18: #{quantized_model_forward.1} parent=0 // pred_check
    _
  $region19: #{quantized_model_forward.1} parent=0 // pred_check_branch
    %23 = sbr.rel (0) target = $region21
  $region20: #{quantized_model_forward.1} parent=0 // pred_region
    _
  $region21: #{quantized_model_forward.1} parent=0 // pred_fallthru
    _
  // Predicated region
  $region22: #{quantized_model_forward.1} parent=0 // pred_check
    _
  $region23: #{quantized_model_forward.1} parent=0 // pred_check_branch
    %25 = sbr.rel (0) target = $region25
  $region24: #{quantized_model_forward.1} parent=0 // pred_region
    _
  $region25: #{quantized_model_forward.1} parent=0 // pred_fallthru
    _
  // Predicated region
  $region26: #{quantized_model_forward.1} parent=0 // pred_check
    _
  $region27: #{quantized_model_forward.1} parent=0 // pred_check_branch
    %27 = sbr.rel (0) target = $region29
  $region28: #{quantized_model_forward.1} parent=0 // pred_region
    _
  $region29: #{quantized_model_forward.1} parent=0 // pred_fallthru
    _
  // Predicated region
  $region30: #{quantized_model_forward.1} parent=0 // pred_check
    _
  $region31: #{quantized_model_forward.1} parent=0 // pred_check_branch
    %29 = sbr.rel (0) target = $region33
  $region32: #{quantized_model_forward.1} parent=0 // pred_region
    _
  $region33: #{quantized_model_forward.1} parent=0 // pred_fallthru
    _
  // Predicated region
  $region34: #{quantized_model_forward.1} parent=0 // pred_check
    _
  $region35: #{quantized_model_forward.1} parent=0 // pred_check_branch
    %31 = sbr.rel (0) target = $region37
  $region36: #{quantized_model_forward.1} parent=0 // pred_region
    _
  $region37: #{quantized_model_forward.1} parent=0 // pred_fallthru
    _
  %33 = vst [vmem:[%s9] sm:$0x3] 0
  %34 = vst [vmem:[#allocation2] sm:$0xff] 0.0
  %35 = vst [vmem:[#allocation2 + $0x8] sm:$0xff] 0.0
  %36 = vst [vmem:[#allocation2 + $0x10] sm:$0xff] 0.0
  %37 = vst [vmem:[#allocation2 + $0x18] sm:$0xff] 0.0
  %38 = vst [vmem:[#allocation2 + $0x20] sm:$0xff] 0.0
  %39 = vst [vmem:[#allocation2 + $0x28] sm:$0xff] 0.0
  %40 = vst [vmem:[#allocation2 + $0x30] sm:$0xff] 0.0
  %41 = vst [vmem:[#allocation2 + $0x38] sm:$0xff] 0.0
  %42 = vst [vmem:[#allocation2 + $0x40] sm:$0xff] 0.0
  %43 = vst [vmem:[#allocation2 + $0x48] sm:$0xff] 0.0
  %44 = vst [vmem:[#allocation2 + $0x50] sm:$0xff] 0.0
  %45 = vst [vmem:[#allocation2 + $0x58] sm:$0xff] 0.0
  %46 = vst [vmem:[#allocation2 + $0x60] sm:$0xff] 0.0
  %47 = vst [vmem:[#allocation2 + $0x68] sm:$0xff] 0.0
  %48 = vst [vmem:[#allocation2 + $0x70] sm:$0xff] 0.0
  %49 = vst [vmem:[#allocation2 + $0x78] sm:$0xff] 0.0
  %50 = vst [vmem:[#allocation2 + $0x80] sm:$0xff] 0.0
  %51 = vst [vmem:[#allocation2 + $0x88] sm:$0xff] 0.0
  %52 = vst [vmem:[#allocation2 + $0x90] sm:$0xff] 0.0
  %53 = vst [vmem:[#allocation2 + $0x98] sm:$0xff] 0.0
  %54 = vst [vmem:[#allocation2 + $0xa0] sm:$0xff] 0.0
  %55 = vst [vmem:[#allocation2 + $0xa8] sm:$0xff] 0.0
  %56 = vst [vmem:[#allocation2 + $0xb0] sm:$0xff] 0.0
  %57 = vst [vmem:[#allocation2 + $0xb8] sm:$0xff] 0.0
  %58 = vst [vmem:[#allocation2 + $0xc0] sm:$0xff] 0.0
  %59 = vst [vmem:[#allocation2 + $0xc8] sm:$0xff] 0.0
  %60 = vst [vmem:[#allocation2 + $0xd0] sm:$0xff] 0.0
  %61 = vst [vmem:[#allocation2 + $0xd8] sm:$0xff] 0.0
  %62 = vst [vmem:[#allocation2 + $0xe0] sm:$0xff] 0.0
  %63 = vst [vmem:[#allocation2 + $0xe8] sm:$0xff] 0.0
  %64 = vst [vmem:[#allocation2 + $0xf0] sm:$0xff] 0.0
  %65 = vst [vmem:[#allocation2 + $0xf8] sm:$0xff] 0.0
  %66 = vst [vmem:[#allocation3] sm:$0xff] 0.0
  %67 = vst [vmem:[#allocation3 + $0x8] sm:$0xff] 0.0
  %68 = vst [vmem:[#allocation3 + $0x10] sm:$0xff] 0.0
  %69 = vst [vmem:[#allocation3 + $0x18] sm:$0xff] 0.0
  %70 = vst [vmem:[#allocation3 + $0x20] sm:$0xff] 0.0
  %71 = vst [vmem:[#allocation3 + $0x28] sm:$0xff] 0.0
  %72 = vst [vmem:[#allocation3 + $0x30] sm:$0xff] 0.0
  %73 = vst [vmem:[#allocation3 + $0x38] sm:$0xff] 0.0
  %74 = vst [vmem:[#allocation3 + $0x40] sm:$0xff] 0.0
  %75 = vst [vmem:[#allocation3 + $0x48] sm:$0xff] 0.0
  %76 = vst [vmem:[#allocation3 + $0x50] sm:$0xff] 0.0
  %77 = vst [vmem:[#allocation3 + $0x58] sm:$0xff] 0.0
  %78 = vst [vmem:[#allocation3 + $0x60] sm:$0xff] 0.0
  %79 = vst [vmem:[#allocation3 + $0x68] sm:$0xff] 0.0
  %80 = vst [vmem:[#allocation3 + $0x70] sm:$0xff] 0.0
  %81 = vst [vmem:[#allocation3 + $0x78] sm:$0xff] 0.0
  %82 = vst [vmem:[#allocation3 + $0x80] sm:$0xff] 0.0
  %83 = vst [vmem:[#allocation3 + $0x88] sm:$0xff] 0.0
  %84 = vst [vmem:[#allocation3 + $0x90] sm:$0xff] 0.0
  %85 = vst [vmem:[#allocation3 + $0x98] sm:$0xff] 0.0
  %86 = vst [vmem:[#allocation3 + $0xa0] sm:$0xff] 0.0
  %87 = vst [vmem:[#allocation3 + $0xa8] sm:$0xff] 0.0
  %88 = vst [vmem:[#allocation3 + $0xb0] sm:$0xff] 0.0
  %89 = vst [vmem:[#allocation3 + $0xb8] sm:$0xff] 0.0
  %90 = vst [vmem:[#allocation3 + $0xc0] sm:$0xff] 0.0
  %91 = vst [vmem:[#allocation3 + $0xc8] sm:$0xff] 0.0
  %92 = vst [vmem:[#allocation3 + $0xd0] sm:$0xff] 0.0
  %93 = vst [vmem:[#allocation3 + $0xd8] sm:$0xff] 0.0
  %94 = vst [vmem:[#allocation3 + $0xe0] sm:$0xff] 0.0
  %95 = vst [vmem:[#allocation3 + $0xe8] sm:$0xff] 0.0
  %96 = vst [vmem:[#allocation3 + $0xf0] sm:$0xff] 0.0
  %97 = vst [vmem:[#allocation3 + $0xf8] sm:$0xff] 0.0
  %v98 = vld [vmem:[%s4] sm:$0xff]
  %v99 = vld [vmem:[%s4 + $0x8] sm:$0xf]
  %v100 = vld [vmem:[%s4 + $0xc] sm:$0xff]
  %v101 = vld [vmem:[%s4 + $0x14] sm:$0xf]
  %v102 = vld [vmem:[%s4 + $0x18] sm:$0xff]
  %v103 = vld [vmem:[%s4 + $0x20] sm:$0xf]
  %v104 = vld [vmem:[%s4 + $0x24] sm:$0xff]
  %v105 = vld [vmem:[%s4 + $0x2c] sm:$0xf]
  %v106 = vld [vmem:[%s4 + $0x30] sm:$0xff]
  %v107 = vld [vmem:[%s4 + $0x38] sm:$0xf]
  %v108 = vld [vmem:[%s4 + $0x3c] sm:$0xff]
  %v109 = vld [vmem:[%s4 + $0x44] sm:$0xf]
  %v110 = vld [vmem:[%s4 + $0x48] sm:$0xff]
  %v111 = vld [vmem:[%s4 + $0x50] sm:$0xf]
  %v112 = vld [vmem:[%s4 + $0x54] sm:$0xff]
  %v113 = vld [vmem:[%s4 + $0x5c] sm:$0xf]
  %v114 = vld [vmem:[%s4 + $0x60] sm:$0xff]
  %v115 = vld [vmem:[%s4 + $0x68] sm:$0xf]
  %v116 = vld [vmem:[%s4 + $0x6c] sm:$0xff]
  %v117 = vld [vmem:[%s4 + $0x74] sm:$0xf]
  %v118 = vld [vmem:[%s4 + $0x78] sm:$0xff]
  %v119 = vld [vmem:[%s4 + $0x80] sm:$0xf]
  %v120 = vld [vmem:[%s4 + $0x84] sm:$0xff]
  %v121 = vld [vmem:[%s4 + $0x8c] sm:$0xf]
  %v122 = vld [vmem:[%s4 + $0x90] sm:$0xff]
  %v123 = vld [vmem:[%s4 + $0x98] sm:$0xf]
  %v124 = vld [vmem:[%s4 + $0x9c] sm:$0xff]
  %v125 = vld [vmem:[%s4 + $0xa4] sm:$0xf]
  %v126 = vld [vmem:[%s4 + $0xa8] sm:$0xff]
  %v127 = vld [vmem:[%s4 + $0xb0] sm:$0xf]
  %v128 = vld [vmem:[%s4 + $0xb4] sm:$0xff]
  %v129 = vld [vmem:[%s4 + $0xbc] sm:$0xf]
  %v130 = vld [vmem:[%s0] sm:$0xff]
  %v131 = vld [vmem:[%s0 + $0x8] sm:$0xff]
  %v132 = vpack.c.bf16 %v131, %v130
  %v165 = vunpack.c.h.b16 %v98
  %v166 = vunpack.c.l.b16 %v99
  %v167 = vunpack.c.h.b16 %v100
  %v168 = vunpack.c.l.b16 %v101
  %v169 = vunpack.c.h.b16 %v102
  %v170 = vunpack.c.l.b16 %v103
  %v171 = vunpack.c.h.b16 %v104
  %v172 = vunpack.c.l.b16 %v105
  %v173 = vunpack.c.h.b16 %v106
  %v174 = vunpack.c.l.b16 %v107
  %v175 = vunpack.c.h.b16 %v108
  %v176 = vunpack.c.l.b16 %v109
  %v177 = vunpack.c.h.b16 %v110
  %v178 = vunpack.c.l.b16 %v111
  %v179 = vunpack.c.h.b16 %v112
  %v180 = vunpack.c.l.b16 %v113
  %v181 = vunpack.c.h.b16 %v114
  %v182 = vunpack.c.l.b16 %v115
  %v183 = vunpack.c.h.b16 %v116
  %v184 = vunpack.c.l.b16 %v117
  %v185 = vunpack.c.h.b16 %v118
  %v186 = vunpack.c.l.b16 %v119
  %v187 = vunpack.c.h.b16 %v120
  %v188 = vunpack.c.l.b16 %v121
  %v189 = vunpack.c.h.b16 %v122
  %v190 = vunpack.c.l.b16 %v123
  %v191 = vunpack.c.h.b16 %v124
  %v192 = vunpack.c.l.b16 %v125
  %v193 = vunpack.c.h.b16 %v126
  %v194 = vunpack.c.l.b16 %v127
  %v195 = vunpack.c.h.b16 %v128
  %v196 = vunpack.c.l.b16 %v129
  %v197 = vpack.c.b16 %v167, %v165
  %v198 = vpack.c.b16 %v168, %v166
  %v199 = vpack.c.b16 %v171, %v169
  %v200 = vpack.c.b16 %v172, %v170
  %v201 = vpack.c.b16 %v175, %v173
  %v202 = vpack.c.b16 %v176, %v174
  %v203 = vpack.c.b16 %v179, %v177
  %v204 = vpack.c.b16 %v180, %v178
  %v205 = vpack.c.b16 %v183, %v181
  %v206 = vpack.c.b16 %v184, %v182
  %v207 = vpack.c.b16 %v187, %v185
  %v208 = vpack.c.b16 %v188, %v186
  %v209 = vpack.c.b16 %v191, %v189
  %v210 = vpack.c.b16 %v192, %v190
  %v211 = vpack.c.b16 %v195, %v193
  %v212 = vpack.c.b16 %v196, %v194
  %229 = vmatprep.subr.bf16.mxu0 %v212
  %230 = vmatpush1.bf16.msra.mxu0 %v211
  %231 = vmatprep.subr.bf16.mxu0 %v210
  %232 = vmatpush1.bf16.msra.mxu0 %v209
  %233 = vmatprep.subr.bf16.mxu0 %v208
  %234 = vmatpush1.bf16.msra.mxu0 %v207
  %235 = vmatprep.subr.bf16.mxu0 %v206
  %236 = vmatpush1.bf16.msra.mxu0 %v205
  %237 = vmatprep.subr.bf16.mxu0 %v204
  %238 = vmatpush1.bf16.msra.mxu0 %v203
  %239 = vmatprep.subr.bf16.mxu0 %v202
  %240 = vmatpush1.bf16.msra.mxu0 %v201
  %241 = vmatprep.subr.bf16.mxu0 %v200
  %242 = vmatpush1.bf16.msra.mxu0 %v199
  %243 = vmatprep.subr.bf16.mxu0 %v198
  %244 = vmatpush1.bf16.msra.mxu0 %v197
  %245 = vmatprep.subr.bf16.mxu0 0
  %246 = vmatpush2.bf16.msra.mxu0 0
  %247 = vmatprep.subr.bf16.mxu0 0
  %248 = vmatpush2.bf16.msra.mxu0 0
  %249 = vmatprep.subr.bf16.mxu0 0
  %250 = vmatpush2.bf16.msra.mxu0 0
  %251 = vmatprep.subr.bf16.mxu0 0
  %252 = vmatpush2.bf16.msra.mxu0 0
  %253 = vmatprep.subr.bf16.mxu0 0
  %254 = vmatpush2.bf16.msra.mxu0 0
  %255 = vmatprep.subr.bf16.mxu0 0
  %256 = vmatpush2.bf16.msra.mxu0 0
  %257 = vmatprep.subr.bf16.mxu0 0
  %258 = vmatpush2.bf16.msra.mxu0 0
  %259 = vmatprep.subr.bf16.mxu0 0
  %260 = vmatpush2.bf16.msra.mxu0 0
  %261 = vmatprep.mubr.bf16.mxu0 0
  %262 = vmatmul.mubr.bf16.gmra.mxu0 %v132
  %v263 = vpop.f32.mrf.mxu0
  %v264 = vadd.f32 0.0, %v263
  %v265 = vpop.f32.mrf.mxu0
  %v266 = vadd.f32 0.0, %v265
  %v267 = vpop.f32.mrf.mxu0
  %v268 = vadd.f32 0.0, %v267
  %v269 = vpop.f32.mrf.mxu0
  %v270 = vadd.f32 0.0, %v269
  %271 = vdwg.mxu0
  %272 = vst [vmem:[#allocation2] sm:$0xff] %v264
  %273 = vst [vmem:[#allocation3] sm:$0xff] %v266
  %s274 = scalar_lea.vmem [#allocation2], 128
  %275 = vst [vmem:[%s274] sm:$0xff] %v268
  %s276 = scalar_lea.vmem [#allocation3], 128
  %277 = vst [vmem:[%s276] sm:$0xff] %v270
  %v278 = vld [vmem:[%s1] sm:$0x3]
  %279 = vst [vmem:[#allocation4] sm:$0x3] %v278
  %v280 = vld [vmem:[%s2] sm:$0x1]
  %v281 = vld [vmem:[%s2 + $0x1] sm:$0x1]
  %v282 = vlaneseq
  %v283 = vand.u32 %v282, 127
  %v284 = vadd.s32 %v283, 128
  loop: start=0, step=1, limit=50
  $region38: #{quantized_model_forward.1} parent=0 // loop_pre_header
    _
  $region39: #{quantized_model_forward.1} parent=0 // loop_header
    %s286 = sphi 0, %s290
    %p287 = scmp.ge.s32.totalorder %s286, 50
  $region40: #{quantized_model_forward.1} parent=0 // loop_header_branch
    %289 = sbr.rel (%p287) target = $region44
  $region41: #{quantized_model_forward.1} parent=0 // loop_body
    %s291 = sadd.s32 %s286, 7
    %v292 = vld [vmem:[#allocation4] sm:$0x3]
    %v293 = vpack.c.bf16 %v292, %v292
    %v294 = vld [vmem:[%s4] sm:$0xff]
    %v295 = vld [vmem:[%s4 + $0x8] sm:$0xf]
    %v296 = vld [vmem:[%s4 + $0xc] sm:$0xff]
    %v297 = vld [vmem:[%s4 + $0x14] sm:$0xf]
    %v298 = vld [vmem:[%s4 + $0x18] sm:$0xff]
    %v299 = vld [vmem:[%s4 + $0x20] sm:$0xf]
    %v300 = vld [vmem:[%s4 + $0x24] sm:$0xff]
    %v301 = vld [vmem:[%s4 + $0x2c] sm:$0xf]
    %v302 = vld [vmem:[%s4 + $0x30] sm:$0xff]
    %v303 = vld [vmem:[%s4 + $0x38] sm:$0xf]
    %v304 = vld [vmem:[%s4 + $0x3c] sm:$0xff]
    %v305 = vld [vmem:[%s4 + $0x44] sm:$0xf]
    %v306 = vld [vmem:[%s4 + $0x48] sm:$0xff]
    %v307 = vld [vmem:[%s4 + $0x50] sm:$0xf]
    %v308 = vld [vmem:[%s4 + $0x54] sm:$0xff]
    %v309 = vld [vmem:[%s4 + $0x5c] sm:$0xf]
    %v310 = vld [vmem:[%s4 + $0x60] sm:$0xff]
    %v311 = vld [vmem:[%s4 + $0x68] sm:$0xf]
    %v312 = vld [vmem:[%s4 + $0x6c] sm:$0xff]
    %v313 = vld [vmem:[%s4 + $0x74] sm:$0xf]
    %v314 = vld [vmem:[%s4 + $0x78] sm:$0xff]
    %v315 = vld [vmem:[%s4 + $0x80] sm:$0xf]
    %v316 = vld [vmem:[%s4 + $0x84] sm:$0xff]
    %v317 = vld [vmem:[%s4 + $0x8c] sm:$0xf]
    %v318 = vld [vmem:[%s4 + $0x90] sm:$0xff]
    %v319 = vld [vmem:[%s4 + $0x98] sm:$0xf]
    %v320 = vld [vmem:[%s4 + $0x9c] sm:$0xff]
    %v321 = vld [vmem:[%s4 + $0xa4] sm:$0xf]
    %v322 = vld [vmem:[%s4 + $0xa8] sm:$0xff]
    %v323 = vld [vmem:[%s4 + $0xb0] sm:$0xf]
    %v324 = vld [vmem:[%s4 + $0xb4] sm:$0xff]
    %v325 = vld [vmem:[%s4 + $0xbc] sm:$0xf]
    %v358 = vunpack.c.l.b16 %v294
    %v359 = vunpack.c.h.b16 %v294
    %v360 = vunpack.c.l.b16 %v295
    %v361 = vunpack.c.l.b16 %v296
    %v362 = vunpack.c.h.b16 %v296
    %v363 = vunpack.c.l.b16 %v297
    %v364 = vunpack.c.l.b16 %v298
    %v365 = vunpack.c.h.b16 %v298
    %v366 = vunpack.c.l.b16 %v299
    %v367 = vunpack.c.l.b16 %v300
    %v368 = vunpack.c.h.b16 %v300
    %v369 = vunpack.c.l.b16 %v301
    %v370 = vunpack.c.l.b16 %v302
    %v371 = vunpack.c.h.b16 %v302
    %v372 = vunpack.c.l.b16 %v303
    %v373 = vunpack.c.l.b16 %v304
    %v374 = vunpack.c.h.b16 %v304
    %v375 = vunpack.c.l.b16 %v305
    %v376 = vunpack.c.l.b16 %v306
    %v377 = vunpack.c.h.b16 %v306
    %v378 = vunpack.c.l.b16 %v307
    %v379 = vunpack.c.l.b16 %v308
    %v380 = vunpack.c.h.b16 %v308
    %v381 = vunpack.c.l.b16 %v309
    %v382 = vunpack.c.l.b16 %v310
    %v383 = vunpack.c.h.b16 %v310
    %v384 = vunpack.c.l.b16 %v311
    %v385 = vunpack.c.l.b16 %v312
    %v386 = vunpack.c.h.b16 %v312
    %v387 = vunpack.c.l.b16 %v313
    %v388 = vunpack.c.l.b16 %v314
    %v389 = vunpack.c.h.b16 %v314
    %v390 = vunpack.c.l.b16 %v315
    %v391 = vunpack.c.l.b16 %v316
    %v392 = vunpack.c.h.b16 %v316
    %v393 = vunpack.c.l.b16 %v317
    %v394 = vunpack.c.l.b16 %v318
    %v395 = vunpack.c.h.b16 %v318
    %v396 = vunpack.c.l.b16 %v319
    %v397 = vunpack.c.l.b16 %v320
    %v398 = vunpack.c.h.b16 %v320
    %v399 = vunpack.c.l.b16 %v321
    %v400 = vunpack.c.l.b16 %v322
    %v401 = vunpack.c.h.b16 %v322
    %v402 = vunpack.c.l.b16 %v323
    %v403 = vunpack.c.l.b16 %v324
    %v404 = vunpack.c.h.b16 %v324
    %v405 = vunpack.c.l.b16 %v325
    %v406 = vpack.c.b16 %v361, %v358
    %v407 = vpack.c.b16 %v362, %v359
    %v408 = vpack.c.b16 %v363, %v360
    %v409 = vpack.c.b16 %v367, %v364
    %v410 = vpack.c.b16 %v368, %v365
    %v411 = vpack.c.b16 %v369, %v366
    %v412 = vpack.c.b16 %v373, %v370
    %v413 = vpack.c.b16 %v374, %v371
    %v414 = vpack.c.b16 %v375, %v372
    %v415 = vpack.c.b16 %v379, %v376
    %v416 = vpack.c.b16 %v380, %v377
    %v417 = vpack.c.b16 %v381, %v378
    %v418 = vpack.c.b16 %v385, %v382
    %v419 = vpack.c.b16 %v386, %v383
    %v420 = vpack.c.b16 %v387, %v384
    %v421 = vpack.c.b16 %v391, %v388
    %v422 = vpack.c.b16 %v392, %v389
    %v423 = vpack.c.b16 %v393, %v390
    %v424 = vpack.c.b16 %v397, %v394
    %v425 = vpack.c.b16 %v398, %v395
    %v426 = vpack.c.b16 %v399, %v396
    %v427 = vpack.c.b16 %v403, %v400
    %v428 = vpack.c.b16 %v404, %v401
    %v429 = vpack.c.b16 %v405, %v402
    %454 = vmatprep.subr.bf16.mxu0 %v428
    %455 = vmatpush1.bf16.msra.mxu0 %v427
    %456 = vmatprep.subr.bf16.mxu0 %v425
    %457 = vmatpush1.bf16.msra.mxu0 %v424
    %458 = vmatprep.subr.bf16.mxu0 %v422
    %459 = vmatpush1.bf16.msra.mxu0 %v421
    %460 = vmatprep.subr.bf16.mxu0 %v419
    %461 = vmatpush1.bf16.msra.mxu0 %v418
    %462 = vmatprep.subr.bf16.mxu0 %v416
    %463 = vmatpush1.bf16.msra.mxu0 %v415
    %464 = vmatprep.subr.bf16.mxu0 %v413
    %465 = vmatpush1.bf16.msra.mxu0 %v412
    %466 = vmatprep.subr.bf16.mxu0 %v410
    %467 = vmatpush1.bf16.msra.mxu0 %v409
    %468 = vmatprep.subr.bf16.mxu0 %v407
    %469 = vmatpush1.bf16.msra.mxu0 %v406
    %470 = vmatprep.subr.bf16.mxu0 0
    %471 = vmatpush2.bf16.msra.mxu0 0
    %472 = vmatprep.subr.bf16.mxu0 0
    %473 = vmatpush2.bf16.msra.mxu0 0
    %474 = vmatprep.subr.bf16.mxu0 0
    %475 = vmatpush2.bf16.msra.mxu0 0
    %476 = vmatprep.subr.bf16.mxu0 0
    %477 = vmatpush2.bf16.msra.mxu0 0
    %478 = vmatprep.subr.bf16.mxu0 0
    %479 = vmatpush2.bf16.msra.mxu0 0
    %480 = vmatprep.subr.bf16.mxu0 0
    %481 = vmatpush2.bf16.msra.mxu0 0
    %482 = vmatprep.subr.bf16.mxu0 0
    %483 = vmatpush2.bf16.msra.mxu0 0
    %484 = vmatprep.subr.bf16.mxu0 0
    %485 = vmatpush2.bf16.msra.mxu0 0
    %486 = vmatprep.mubr.bf16.mxu0 0
    %487 = vmatmul.mubr.bf16.gmra.mxu0 %v293
    %v488 = vpop.f32.mrf.mxu0
    %v489 = vadd.f32 0.0, %v488
    %v490 = vpop.f32.mrf.mxu0
    %v491 = vadd.f32 0.0, %v490
    %v492 = vpop.f32.mrf.mxu0
    %v493 = vpop.f32.mrf.mxu0
    %494 = vdwg.mxu0
    %495 = vmatprep.subr.bf16.mxu0 0
    %496 = vmatpush1.bf16.msra.mxu0 %v429
    %497 = vmatprep.subr.bf16.mxu0 0
    %498 = vmatpush1.bf16.msra.mxu0 %v426
    %499 = vmatprep.subr.bf16.mxu0 0
    %500 = vmatpush1.bf16.msra.mxu0 %v423
    %501 = vmatprep.subr.bf16.mxu0 0
    %502 = vmatpush1.bf16.msra.mxu0 %v420
    %503 = vmatprep.subr.bf16.mxu0 0
    %504 = vmatpush1.bf16.msra.mxu0 %v417
    %505 = vmatprep.subr.bf16.mxu0 0
    %506 = vmatpush1.bf16.msra.mxu0 %v414
    %507 = vmatprep.subr.bf16.mxu0 0
    %508 = vmatpush1.bf16.msra.mxu0 %v411
    %509 = vmatprep.subr.bf16.mxu0 0
    %510 = vmatpush1.bf16.msra.mxu0 %v408
    %511 = vmatprep.subr.bf16.mxu0 0
    %512 = vmatpush2.bf16.msra.mxu0 0
    %513 = vmatprep.subr.bf16.mxu0 0
    %514 = vmatpush2.bf16.msra.mxu0 0
    %515 = vmatprep.subr.bf16.mxu0 0
    %516 = vmatpush2.bf16.msra.mxu0 0
    %517 = vmatprep.subr.bf16.mxu0 0
    %518 = vmatpush2.bf16.msra.mxu0 0
    %519 = vmatprep.subr.bf16.mxu0 0
    %520 = vmatpush2.bf16.msra.mxu0 0
    %521 = vmatprep.subr.bf16.mxu0 0
    %522 = vmatpush2.bf16.msra.mxu0 0
    %523 = vmatprep.subr.bf16.mxu0 0
    %524 = vmatpush2.bf16.msra.mxu0 0
    %525 = vmatprep.subr.bf16.mxu0 0
    %526 = vmatpush2.bf16.msra.mxu0 0
    %527 = vmatprep.mubr.bf16.mxu0 0
    %528 = vmatmul.mubr.bf16.gmra.mxu0 %v293
    %v529 = vpop.f32.mrf.mxu0
    %v530 = vadd.f32 0.0, %v529
    %v531 = vpop.f32.mrf.mxu0
    %v532 = vpop.f32.mrf.mxu0
    %v533 = vpop.f32.mrf.mxu0
    %534 = vdwg.mxu0
    %v537 = vunpack.c.l.s4 1966171168
    %v538 = vunpack.c.0.s8 %v537
    %v539 = vlaneseq
    %v540 = vshrl.u32 %v539, 7
    %v541 = vsub.s32 %v538, %v540
    %v542 = vrot.slane %v491, %v541
    %v543 = vcombine.high %v542, %v542
    %v545 = vunpack.c.l.s4 1966171168
    %v546 = vunpack.c.0.s8 %v545
    %v547 = vlaneseq
    %v548 = vshrl.u32 %v547, 7
    %v549 = vsub.s32 %v546, %v548
    %v550 = vrot.slane %v542, %v549
    %v552 = vunpack.c.l.s4 1966171168
    %v553 = vunpack.c.0.s8 %v552
    %v554 = vlaneseq
    %v555 = vshrl.u32 %v554, 7
    %v556 = vsub.s32 %v553, %v555
    %v557 = vrot.slane %v543, %v556
    %s560 = scalar_lea.vmem [#allocation2], %s291
    %561 = vst [vmem:[%s560] sm:$0x1] %v550
    %562 = vst [vmem:[%s560 + $0x80] sm:$0x1] %v557
    %v565 = vunpack.c.l.s4 1966171168
    %v566 = vunpack.c.0.s8 %v565
    %v567 = vlaneseq
    %v568 = vshrl.u32 %v567, 7
    %v569 = vsub.s32 %v566, %v568
    %v570 = vrot.slane %v530, %v569
    %v571 = vcombine.high %v570, %v570
    %v573 = vunpack.c.l.s4 1966171168
    %v574 = vunpack.c.0.s8 %v573
    %v575 = vlaneseq
    %v576 = vshrl.u32 %v575, 7
    %v577 = vsub.s32 %v574, %v576
    %v578 = vrot.slane %v570, %v577
    %v580 = vunpack.c.l.s4 1966171168
    %v581 = vunpack.c.0.s8 %v580
    %v582 = vlaneseq
    %v583 = vshrl.u32 %v582, 7
    %v584 = vsub.s32 %v581, %v583
    %v585 = vrot.slane %v571, %v584
    %s588 = scalar_lea.vmem [#allocation3], %s291
    %589 = vst [vmem:[%s588] sm:$0x1] %v578
    %590 = vst [vmem:[%s588 + $0x80] sm:$0x1] %v585
    %v593 = vunpack.c.l.s4 1966171168
    %v594 = vunpack.c.0.s8 %v593
    %v595 = vlaneseq
    %v596 = vshrl.u32 %v595, 7
    %v597 = vsub.s32 %v594, %v596
    %v598 = vrot.slane %v489, %v597
    %v599 = vcombine.high %v598, %v598
    %v601 = vunpack.c.l.s4 1966171168
    %v602 = vunpack.c.0.s8 %v601
    %v603 = vlaneseq
    %v604 = vshrl.u32 %v603, 7
    %v605 = vsub.s32 %v602, %v604
    %v606 = vrot.slane %v598, %v605
    %v608 = vunpack.c.l.s4 1966171168
    %v609 = vunpack.c.0.s8 %v608
    %v610 = vlaneseq
    %v611 = vshrl.u32 %v610, 7
    %v612 = vsub.s32 %v609, %v611
    %v613 = vrot.slane %v599, %v612
    %v616 = vpack.c.bf16 %v606, %v606
    %v617 = vpack.c.bf16 %v613, %v613
    %v618 = vld [vmem:[#allocation2] sm:$0xff]
    %v619 = vld [vmem:[#allocation2 + $0x8] sm:$0xff]
    %v620 = vld [vmem:[#allocation2 + $0x10] sm:$0xff]
    %v621 = vld [vmem:[#allocation2 + $0x18] sm:$0xff]
    %v622 = vld [vmem:[#allocation2 + $0x20] sm:$0xff]
    %v623 = vld [vmem:[#allocation2 + $0x28] sm:$0xff]
    %v624 = vld [vmem:[#allocation2 + $0x30] sm:$0xff]
    %v625 = vld [vmem:[#allocation2 + $0x38] sm:$0xff]
    %v626 = vld [vmem:[#allocation2 + $0x40] sm:$0xff]
    %v627 = vld [vmem:[#allocation2 + $0x48] sm:$0xff]
    %v628 = vld [vmem:[#allocation2 + $0x50] sm:$0xff]
    %v629 = vld [vmem:[#allocation2 + $0x58] sm:$0xff]
    %v630 = vld [vmem:[#allocation2 + $0x60] sm:$0xff]
    %v631 = vld [vmem:[#allocation2 + $0x68] sm:$0xff]
    %v632 = vld [vmem:[#allocation2 + $0x70] sm:$0xff]
    %v633 = vld [vmem:[#allocation2 + $0x78] sm:$0xff]
    %v634 = vld [vmem:[#allocation2 + $0x80] sm:$0xff]
    %v635 = vld [vmem:[#allocation2 + $0x88] sm:$0xff]
    %v636 = vld [vmem:[#allocation2 + $0x90] sm:$0xff]
    %v637 = vld [vmem:[#allocation2 + $0x98] sm:$0xff]
    %v638 = vld [vmem:[#allocation2 + $0xa0] sm:$0xff]
    %v639 = vld [vmem:[#allocation2 + $0xa8] sm:$0xff]
    %v640 = vld [vmem:[#allocation2 + $0xb0] sm:$0xff]
    %v641 = vld [vmem:[#allocation2 + $0xb8] sm:$0xff]
    %v642 = vld [vmem:[#allocation2 + $0xc0] sm:$0xff]
    %v643 = vld [vmem:[#allocation2 + $0xc8] sm:$0xff]
    %v644 = vld [vmem:[#allocation2 + $0xd0] sm:$0xff]
    %v645 = vld [vmem:[#allocation2 + $0xd8] sm:$0xff]
    %v646 = vld [vmem:[#allocation2 + $0xe0] sm:$0xff]
    %v647 = vld [vmem:[#allocation2 + $0xe8] sm:$0xff]
    %v648 = vld [vmem:[#allocation2 + $0xf0] sm:$0xff]
    %v649 = vld [vmem:[#allocation2 + $0xf8] sm:$0xff]
    %v650 = vpack.c.bf16 %v619, %v618
    %v651 = vpack.c.bf16 %v621, %v620
    %v652 = vpack.c.bf16 %v623, %v622
    %v653 = vpack.c.bf16 %v625, %v624
    %v654 = vpack.c.bf16 %v627, %v626
    %v655 = vpack.c.bf16 %v629, %v628
    %v656 = vpack.c.bf16 %v631, %v630
    %v657 = vpack.c.bf16 %v633, %v632
    %v658 = vpack.c.bf16 %v635, %v634
    %v659 = vpack.c.bf16 %v637, %v636
    %v660 = vpack.c.bf16 %v639, %v638
    %v661 = vpack.c.bf16 %v641, %v640
    %v662 = vpack.c.bf16 %v643, %v642
    %v663 = vpack.c.bf16 %v645, %v644
    %v664 = vpack.c.bf16 %v647, %v646
    %v665 = vpack.c.bf16 %v649, %v648
    %v666 = vld [vmem:[#allocation3] sm:$0xff]
    %v667 = vld [vmem:[#allocation3 + $0x8] sm:$0xff]
    %v668 = vld [vmem:[#allocation3 + $0x10] sm:$0xff]
    %v669 = vld [vmem:[#allocation3 + $0x18] sm:$0xff]
    %v670 = vld [vmem:[#allocation3 + $0x20] sm:$0xff]
    %v671 = vld [vmem:[#allocation3 + $0x28] sm:$0xff]
    %v672 = vld [vmem:[#allocation3 + $0x30] sm:$0xff]
    %v673 = vld [vmem:[#allocation3 + $0x38] sm:$0xff]
    %v674 = vld [vmem:[#allocation3 + $0x40] sm:$0xff]
    %v675 = vld [vmem:[#allocation3 + $0x48] sm:$0xff]
    %v676 = vld [vmem:[#allocation3 + $0x50] sm:$0xff]
    %v677 = vld [vmem:[#allocation3 + $0x58] sm:$0xff]
    %v678 = vld [vmem:[#allocation3 + $0x60] sm:$0xff]
    %v679 = vld [vmem:[#allocation3 + $0x68] sm:$0xff]
    %v680 = vld [vmem:[#allocation3 + $0x70] sm:$0xff]
    %v681 = vld [vmem:[#allocation3 + $0x78] sm:$0xff]
    %v682 = vld [vmem:[#allocation3 + $0x80] sm:$0xff]
    %v683 = vld [vmem:[#allocation3 + $0x88] sm:$0xff]
    %v684 = vld [vmem:[#allocation3 + $0x90] sm:$0xff]
    %v685 = vld [vmem:[#allocation3 + $0x98] sm:$0xff]
    %v686 = vld [vmem:[#allocation3 + $0xa0] sm:$0xff]
    %v687 = vld [vmem:[#allocation3 + $0xa8] sm:$0xff]
    %v688 = vld [vmem:[#allocation3 + $0xb0] sm:$0xff]
    %v689 = vld [vmem:[#allocation3 + $0xb8] sm:$0xff]
    %v690 = vld [vmem:[#allocation3 + $0xc0] sm:$0xff]
    %v691 = vld [vmem:[#allocation3 + $0xc8] sm:$0xff]
    %v692 = vld [vmem:[#allocation3 + $0xd0] sm:$0xff]
    %v693 = vld [vmem:[#allocation3 + $0xd8] sm:$0xff]
    %v694 = vld [vmem:[#allocation3 + $0xe0] sm:$0xff]
    %v695 = vld [vmem:[#allocation3 + $0xe8] sm:$0xff]
    %v696 = vld [vmem:[#allocation3 + $0xf0] sm:$0xff]
    %v697 = vld [vmem:[#allocation3 + $0xf8] sm:$0xff]
    %v698 = vpack.c.bf16 %v667, %v666
    %v699 = vpack.c.bf16 %v669, %v668
    %v700 = vpack.c.bf16 %v671, %v670
    %v701 = vpack.c.bf16 %v673, %v672
    %v702 = vpack.c.bf16 %v675, %v674
    %v703 = vpack.c.bf16 %v677, %v676
    %v704 = vpack.c.bf16 %v679, %v678
    %v705 = vpack.c.bf16 %v681, %v680
    %v706 = vpack.c.bf16 %v683, %v682
    %v707 = vpack.c.bf16 %v685, %v684
    %v708 = vpack.c.bf16 %v687, %v686
    %v709 = vpack.c.bf16 %v689, %v688
    %v710 = vpack.c.bf16 %v691, %v690
    %v711 = vpack.c.bf16 %v693, %v692
    %v712 = vpack.c.bf16 %v695, %v694
    %v713 = vpack.c.bf16 %v697, %v696
    %714 = vmatprep.subr.bf16.mxu0 0
    %715 = vmatpush1.bf16.xpose.msra.mxu0 %v657
    %716 = vmatprep.subr.bf16.mxu0 0
    %717 = vmatpush1.bf16.xpose.msra.mxu0 %v656
    %718 = vmatprep.subr.bf16.mxu0 0
    %719 = vmatpush1.bf16.xpose.msra.mxu0 %v655
    %720 = vmatprep.subr.bf16.mxu0 0
    %721 = vmatpush1.bf16.xpose.msra.mxu0 %v654
    %722 = vmatprep.subr.bf16.mxu0 0
    %723 = vmatpush1.bf16.xpose.msra.mxu0 %v653
    %724 = vmatprep.subr.bf16.mxu0 0
    %725 = vmatpush1.bf16.xpose.msra.mxu0 %v652
    %726 = vmatprep.subr.bf16.mxu0 0
    %727 = vmatpush1.bf16.xpose.msra.mxu0 %v651
    %728 = vmatprep.subr.bf16.mxu0 0
    %729 = vmatpush1.bf16.xpose.msra.mxu0 %v650
    %730 = vmatprep.subr.bf16.mxu0 0
    %731 = vmatpush2.bf16.xpose.msra.mxu0 0
    %732 = vmatprep.subr.bf16.mxu0 0
    %733 = vmatpush2.bf16.xpose.msra.mxu0 0
    %734 = vmatprep.subr.bf16.mxu0 0
    %735 = vmatpush2.bf16.xpose.msra.mxu0 0
    %736 = vmatprep.subr.bf16.mxu0 0
    %737 = vmatpush2.bf16.xpose.msra.mxu0 0
    %738 = vmatprep.subr.bf16.mxu0 0
    %739 = vmatpush2.bf16.xpose.msra.mxu0 0
    %740 = vmatprep.subr.bf16.mxu0 0
    %741 = vmatpush2.bf16.xpose.msra.mxu0 0
    %742 = vmatprep.subr.bf16.mxu0 0
    %743 = vmatpush2.bf16.xpose.msra.mxu0 0
    %744 = vmatprep.subr.bf16.mxu0 0
    %745 = vmatpush2.bf16.xpose.msra.mxu0 0
    %746 = vmatprep.mubr.bf16.mxu0 0
    %747 = vmatmul.mubr.bf16.gmra.mxu0 %v616
    %v748 = vpop.f32.mrf.mxu0
    %v749 = vadd.f32 %v280, %v748
    %v750 = vpop.f32.mrf.mxu0
    %v751 = vpop.f32.mrf.mxu0
    %v752 = vpop.f32.mrf.mxu0
    %753 = vdwg.mxu0
    %754 = vmatprep.subr.bf16.mxu0 0
    %755 = vmatpush1.bf16.xpose.msra.mxu0 %v665
    %756 = vmatprep.subr.bf16.mxu0 0
    %757 = vmatpush1.bf16.xpose.msra.mxu0 %v664
    %758 = vmatprep.subr.bf16.mxu0 0
    %759 = vmatpush1.bf16.xpose.msra.mxu0 %v663
    %760 = vmatprep.subr.bf16.mxu0 0
    %761 = vmatpush1.bf16.xpose.msra.mxu0 %v662
    %762 = vmatprep.subr.bf16.mxu0 0
    %763 = vmatpush1.bf16.xpose.msra.mxu0 %v661
    %764 = vmatprep.subr.bf16.mxu0 0
    %765 = vmatpush1.bf16.xpose.msra.mxu0 %v660
    %766 = vmatprep.subr.bf16.mxu0 0
    %767 = vmatpush1.bf16.xpose.msra.mxu0 %v659
    %768 = vmatprep.subr.bf16.mxu0 0
    %769 = vmatpush1.bf16.xpose.msra.mxu0 %v658
    %770 = vmatprep.subr.bf16.mxu0 0
    %771 = vmatpush2.bf16.xpose.msra.mxu0 0
    %772 = vmatprep.subr.bf16.mxu0 0
    %773 = vmatpush2.bf16.xpose.msra.mxu0 0
    %774 = vmatprep.subr.bf16.mxu0 0
    %775 = vmatpush2.bf16.xpose.msra.mxu0 0
    %776 = vmatprep.subr.bf16.mxu0 0
    %777 = vmatpush2.bf16.xpose.msra.mxu0 0
    %778 = vmatprep.subr.bf16.mxu0 0
    %779 = vmatpush2.bf16.xpose.msra.mxu0 0
    %780 = vmatprep.subr.bf16.mxu0 0
    %781 = vmatpush2.bf16.xpose.msra.mxu0 0
    %782 = vmatprep.subr.bf16.mxu0 0
    %783 = vmatpush2.bf16.xpose.msra.mxu0 0
    %784 = vmatprep.subr.bf16.mxu0 0
    %785 = vmatpush2.bf16.xpose.msra.mxu0 0
    %786 = vmatprep.mubr.bf16.mxu0 0
    %787 = vmatmul.mubr.bf16.gmra.mxu0 %v617
    %v788 = vpop.f32.mrf.mxu0
    %v789 = vadd.f32 %v281, %v788
    %v790 = vpop.f32.mrf.mxu0
    %v791 = vpop.f32.mrf.mxu0
    %v792 = vpop.f32.mrf.mxu0
    %793 = vdwg.mxu0
    %v794 = vstv %s291
    %vm795 = vcmp.le.s32.totalorder %v283, %v794
    %v796 = vsel %vm795, %v749, -1e+30
    %v797 = vsel %vm795, %v789, -1e+30
    %vm798 = vcmask 1040384
    %v799 = vsel %vm798, %v796, -inf
    %800 = vmax.xlane.f32.xlu0 %v799
    %v801 = vpop.xlane.xlu0 %800
    %v802 = vsel %vm798, %v797, -inf
    %803 = vmax.xlane.f32.xlu0 %v802
    %v804 = vpop.xlane.xlu0 %803
    %v805 = vsub.f32 %v796, %v801
    %v806 = vsub.f32 %v797, %v804
    %v807 = vmul.f32 %v805, 1.442695
    %v808 = vpow.pop %v807
    %v809 = vmul.f32 %v806, 1.442695
    %v810 = vpow.pop %v809
    %v811 = vsel %vm798, %v808, 0.0
    %812 = vadd.xlane.f32.xlu0 %v811
    %v813 = vpop.xlane.xlu0 %812
    %v814 = vsel %vm798, %v810, 0.0
    %815 = vadd.xlane.f32.xlu0 %v814
    %v816 = vpop.xlane.xlu0 %815
    %v817 = vpack.c.bf16 %v808, %v808
    %v818 = vpack.c.bf16 %v810, %v810
    %819 = vmatprep.subr.bf16.mxu0 0
    %820 = vmatpush1.bf16.msra.mxu0 %v705
    %821 = vmatprep.subr.bf16.mxu0 0
    %822 = vmatpush1.bf16.msra.mxu0 %v704
    %823 = vmatprep.subr.bf16.mxu0 0
    %824 = vmatpush1.bf16.msra.mxu0 %v703
    %825 = vmatprep.subr.bf16.mxu0 0
    %826 = vmatpush1.bf16.msra.mxu0 %v702
    %827 = vmatprep.subr.bf16.mxu0 0
    %828 = vmatpush1.bf16.msra.mxu0 %v701
    %829 = vmatprep.subr.bf16.mxu0 0
    %830 = vmatpush1.bf16.msra.mxu0 %v700
    %831 = vmatprep.subr.bf16.mxu0 0
    %832 = vmatpush1.bf16.msra.mxu0 %v699
    %833 = vmatprep.subr.bf16.mxu0 0
    %834 = vmatpush1.bf16.msra.mxu0 %v698
    %835 = vmatprep.subr.bf16.mxu0 0
    %836 = vmatpush2.bf16.msra.mxu0 0
    %837 = vmatprep.subr.bf16.mxu0 0
    %838 = vmatpush2.bf16.msra.mxu0 0
    %839 = vmatprep.subr.bf16.mxu0 0
    %840 = vmatpush2.bf16.msra.mxu0 0
    %841 = vmatprep.subr.bf16.mxu0 0
    %842 = vmatpush2.bf16.msra.mxu0 0
    %843 = vmatprep.subr.bf16.mxu0 0
    %844 = vmatpush2.bf16.msra.mxu0 0
    %845 = vmatprep.subr.bf16.mxu0 0
    %846 = vmatpush2.bf16.msra.mxu0 0
    %847 = vmatprep.subr.bf16.mxu0 0
    %848 = vmatpush2.bf16.msra.mxu0 0
    %849 = vmatprep.subr.bf16.mxu0 0
    %850 = vmatpush2.bf16.msra.mxu0 0
    %851 = vmatprep.mubr.bf16.mxu0 0
    %852 = vmatmul.mubr.bf16.gmra.mxu0 %v817
    %v853 = vpop.f32.mrf.mxu0
    %v854 = vadd.f32 0.0, %v853
    %v855 = vpop.f32.mrf.mxu0
    %v856 = vpop.f32.mrf.mxu0
    %v857 = vpop.f32.mrf.mxu0
    %858 = vdwg.mxu0
    %859 = vmatprep.subr.bf16.mxu0 0
    %860 = vmatpush1.bf16.msra.mxu0 %v713
    %861 = vmatprep.subr.bf16.mxu0 0
    %862 = vmatpush1.bf16.msra.mxu0 %v712
    %863 = vmatprep.subr.bf16.mxu0 0
    %864 = vmatpush1.bf16.msra.mxu0 %v711
    %865 = vmatprep.subr.bf16.mxu0 0
    %866 = vmatpush1.bf16.msra.mxu0 %v710
    %867 = vmatprep.subr.bf16.mxu0 0
    %868 = vmatpush1.bf16.msra.mxu0 %v709
    %869 = vmatprep.subr.bf16.mxu0 0
    %870 = vmatpush1.bf16.msra.mxu0 %v708
    %871 = vmatprep.subr.bf16.mxu0 0
    %872 = vmatpush1.bf16.msra.mxu0 %v707
    %873 = vmatprep.subr.bf16.mxu0 0
    %874 = vmatpush1.bf16.msra.mxu0 %v706
    %875 = vmatprep.subr.bf16.mxu0 0
    %876 = vmatpush2.bf16.msra.mxu0 0
    %877 = vmatprep.subr.bf16.mxu0 0
    %878 = vmatpush2.bf16.msra.mxu0 0
    %879 = vmatprep.subr.bf16.mxu0 0
    %880 = vmatpush2.bf16.msra.mxu0 0
    %881 = vmatprep.subr.bf16.mxu0 0
    %882 = vmatpush2.bf16.msra.mxu0 0
    %883 = vmatprep.subr.bf16.mxu0 0
    %884 = vmatpush2.bf16.msra.mxu0 0
    %885 = vmatprep.subr.bf16.mxu0 0
    %886 = vmatpush2.bf16.msra.mxu0 0
    %887 = vmatprep.subr.bf16.mxu0 0
    %888 = vmatpush2.bf16.msra.mxu0 0
    %889 = vmatprep.subr.bf16.mxu0 0
    %890 = vmatpush2.bf16.msra.mxu0 0
    %891 = vmatprep.mubr.bf16.mxu0 0
    %892 = vmatmul.mubr.bf16.gmra.mxu0 %v818
    %v893 = vpop.f32.mrf.mxu0
    %v894 = vadd.f32 0.0, %v893
    %v895 = vpop.f32.mrf.mxu0
    %v896 = vpop.f32.mrf.mxu0
    %v897 = vpop.f32.mrf.mxu0
    %898 = vdwg.mxu0
    %v899 = vrcp.pop %v813
    %v900 = vrcp.pop %v816
    %v901 = vmul.f32 %v854, %v899
    %v902 = vmul.f32 %v894, %v900
    %v903 = vpack.c.bf16 %v901, %v901
    %v904 = vpack.c.bf16 %v902, %v902
    %v905 = vld [vmem:[%s5] sm:$0xf]
    %v906 = vld [vmem:[%s5 + $0x4] sm:$0xf]
    %v907 = vld [vmem:[%s5 + $0x8] sm:$0xf]
    %v908 = vld [vmem:[%s5 + $0xc] sm:$0xf]
    %v909 = vld [vmem:[%s5 + $0x10] sm:$0xf]
    %v910 = vld [vmem:[%s5 + $0x14] sm:$0xf]
    %v911 = vld [vmem:[%s5 + $0x18] sm:$0xf]
    %v912 = vld [vmem:[%s5 + $0x1c] sm:$0xf]
    %v913 = vld [vmem:[%s5 + $0x20] sm:$0xf]
    %v914 = vld [vmem:[%s5 + $0x24] sm:$0xf]
    %v915 = vld [vmem:[%s5 + $0x28] sm:$0xf]
    %v916 = vld [vmem:[%s5 + $0x2c] sm:$0xf]
    %v917 = vld [vmem:[%s5 + $0x30] sm:$0xf]
    %v918 = vld [vmem:[%s5 + $0x34] sm:$0xf]
    %v919 = vld [vmem:[%s5 + $0x38] sm:$0xf]
    %v920 = vld [vmem:[%s5 + $0x3c] sm:$0xf]
    %v923 = vunpack.c.l.b16 %v903
    %v924 = vunpack.c.l.b16 %v904
    %v925 = vrot.slane %v924, 7
    %vm926 = vcmask 1041409
    %v927 = vsel %vm926, %v925, %v923
    %v928 = vpack.c.b16 %v927, %v927
    %v946 = vunpack.c.l.b16 %v905
    %v947 = vunpack.c.l.b16 %v906
    %v948 = vunpack.c.l.b16 %v907
    %v949 = vunpack.c.l.b16 %v908
    %v950 = vunpack.c.l.b16 %v909
    %v951 = vunpack.c.l.b16 %v910
    %v952 = vunpack.c.l.b16 %v911
    %v953 = vunpack.c.l.b16 %v912
    %v954 = vunpack.c.l.b16 %v913
    %v955 = vunpack.c.l.b16 %v914
    %v956 = vunpack.c.l.b16 %v915
    %v957 = vunpack.c.l.b16 %v916
    %v958 = vunpack.c.l.b16 %v917
    %v959 = vunpack.c.l.b16 %v918
    %v960 = vunpack.c.l.b16 %v919
    %v961 = vunpack.c.l.b16 %v920
    %v962 = vpack.c.b16 %v947, %v946
    %v963 = vpack.c.b16 %v949, %v948
    %v964 = vpack.c.b16 %v951, %v950
    %v965 = vpack.c.b16 %v953, %v952
    %v966 = vpack.c.b16 %v955, %v954
    %v967 = vpack.c.b16 %v957, %v956
    %v968 = vpack.c.b16 %v959, %v958
    %v969 = vpack.c.b16 %v961, %v960
    %978 = vmatprep.subr.bf16.mxu0 0
    %979 = vmatpush1.bf16.msra.mxu0 %v969
    %980 = vmatprep.subr.bf16.mxu0 0
    %981 = vmatpush1.bf16.msra.mxu0 %v968
    %982 = vmatprep.subr.bf16.mxu0 0
    %983 = vmatpush1.bf16.msra.mxu0 %v967
    %984 = vmatprep.subr.bf16.mxu0 0
    %985 = vmatpush1.bf16.msra.mxu0 %v966
    %986 = vmatprep.subr.bf16.mxu0 0
    %987 = vmatpush1.bf16.msra.mxu0 %v965
    %988 = vmatprep.subr.bf16.mxu0 0
    %989 = vmatpush1.bf16.msra.mxu0 %v964
    %990 = vmatprep.subr.bf16.mxu0 0
    %991 = vmatpush1.bf16.msra.mxu0 %v963
    %992 = vmatprep.subr.bf16.mxu0 0
    %993 = vmatpush1.bf16.msra.mxu0 %v962
    %994 = vmatprep.subr.bf16.mxu0 0
    %995 = vmatpush2.bf16.msra.mxu0 0
    %996 = vmatprep.subr.bf16.mxu0 0
    %997 = vmatpush2.bf16.msra.mxu0 0
    %998 = vmatprep.subr.bf16.mxu0 0
    %999 = vmatpush2.bf16.msra.mxu0 0
    %1000 = vmatprep.subr.bf16.mxu0 0
    %1001 = vmatpush2.bf16.msra.mxu0 0
    %1002 = vmatprep.subr.bf16.mxu0 0
    %1003 = vmatpush2.bf16.msra.mxu0 0
    %1004 = vmatprep.subr.bf16.mxu0 0
    %1005 = vmatpush2.bf16.msra.mxu0 0
    %1006 = vmatprep.subr.bf16.mxu0 0
    %1007 = vmatpush2.bf16.msra.mxu0 0
    %1008 = vmatprep.subr.bf16.mxu0 0
    %1009 = vmatpush2.bf16.msra.mxu0 0
    %1010 = vmatprep.mubr.bf16.mxu0 0
    %1011 = vmatmul.mubr.bf16.gmra.mxu0 %v928
    %v1012 = vpop.f32.mrf.mxu0
    %v1013 = vadd.f32 0.0, %v1012
    %v1014 = vpop.f32.mrf.mxu0
    %v1015 = vpop.f32.mrf.mxu0
    %v1016 = vpop.f32.mrf.mxu0
    %1017 = vdwg.mxu0
    %v1018 = vadd.f32 %v292, %v1013
    %v1019 = vpack.c.bf16 %v1018, %v1018
    %v1020 = vld [vmem:[%s6] sm:$0xff]
    %v1021 = vld [vmem:[%s6 + $0x8] sm:$0xff]
    %v1022 = vld [vmem:[%s6 + $0x10] sm:$0xff]
    %v1023 = vld [vmem:[%s6 + $0x18] sm:$0xff]
    %v1024 = vld [vmem:[%s6 + $0x20] sm:$0xff]
    %v1025 = vld [vmem:[%s6 + $0x28] sm:$0xff]
    %v1026 = vld [vmem:[%s6 + $0x30] sm:$0xff]
    %v1027 = vld [vmem:[%s6 + $0x38] sm:$0xff]
    %v1028 = vld [vmem:[%s6 + $0x40] sm:$0xff]
    %v1029 = vld [vmem:[%s6 + $0x48] sm:$0xff]
    %v1030 = vld [vmem:[%s6 + $0x50] sm:$0xff]
    %v1031 = vld [vmem:[%s6 + $0x58] sm:$0xff]
    %v1032 = vld [vmem:[%s6 + $0x60] sm:$0xff]
    %v1033 = vld [vmem:[%s6 + $0x68] sm:$0xff]
    %v1034 = vld [vmem:[%s6 + $0x70] sm:$0xff]
    %v1035 = vld [vmem:[%s6 + $0x78] sm:$0xff]
    %v1052 = vunpack.c.l.b16 %v1020
    %v1053 = vunpack.c.h.b16 %v1020
    %v1054 = vunpack.c.l.b16 %v1021
    %v1055 = vunpack.c.h.b16 %v1021
    %v1056 = vunpack.c.l.b16 %v1022
    %v1057 = vunpack.c.h.b16 %v1022
    %v1058 = vunpack.c.l.b16 %v1023
    %v1059 = vunpack.c.h.b16 %v1023
    %v1060 = vunpack.c.l.b16 %v1024
    %v1061 = vunpack.c.h.b16 %v1024
    %v1062 = vunpack.c.l.b16 %v1025
    %v1063 = vunpack.c.h.b16 %v1025
    %v1064 = vunpack.c.l.b16 %v1026
    %v1065 = vunpack.c.h.b16 %v1026
    %v1066 = vunpack.c.l.b16 %v1027
    %v1067 = vunpack.c.h.b16 %v1027
    %v1068 = vunpack.c.l.b16 %v1028
    %v1069 = vunpack.c.h.b16 %v1028
    %v1070 = vunpack.c.l.b16 %v1029
    %v1071 = vunpack.c.h.b16 %v1029
    %v1072 = vunpack.c.l.b16 %v1030
    %v1073 = vunpack.c.h.b16 %v1030
    %v1074 = vunpack.c.l.b16 %v1031
    %v1075 = vunpack.c.h.b16 %v1031
    %v1076 = vunpack.c.l.b16 %v1032
    %v1077 = vunpack.c.h.b16 %v1032
    %v1078 = vunpack.c.l.b16 %v1033
    %v1079 = vunpack.c.h.b16 %v1033
    %v1080 = vunpack.c.l.b16 %v1034
    %v1081 = vunpack.c.h.b16 %v1034
    %v1082 = vunpack.c.l.b16 %v1035
    %v1083 = vunpack.c.h.b16 %v1035
    %v1084 = vpack.c.b16 %v1054, %v1052
    %v1085 = vpack.c.b16 %v1055, %v1053
    %v1086 = vpack.c.b16 %v1058, %v1056
    %v1087 = vpack.c.b16 %v1059, %v1057
    %v1088 = vpack.c.b16 %v1062, %v1060
    %v1089 = vpack.c.b16 %v1063, %v1061
    %v1090 = vpack.c.b16 %v1066, %v1064
    %v1091 = vpack.c.b16 %v1067, %v1065
    %v1092 = vpack.c.b16 %v1070, %v1068
    %v1093 = vpack.c.b16 %v1071, %v1069
    %v1094 = vpack.c.b16 %v1074, %v1072
    %v1095 = vpack.c.b16 %v1075, %v1073
    %v1096 = vpack.c.b16 %v1078, %v1076
    %v1097 = vpack.c.b16 %v1079, %v1077
    %v1098 = vpack.c.b16 %v1082, %v1080
    %v1099 = vpack.c.b16 %v1083, %v1081
    %1116 = vmatprep.subr.bf16.mxu0 %v1099
    %1117 = vmatpush1.bf16.msra.mxu0 %v1098
    %1118 = vmatprep.subr.bf16.mxu0 %v1097
    %1119 = vmatpush1.bf16.msra.mxu0 %v1096
    %1120 = vmatprep.subr.bf16.mxu0 %v1095
    %1121 = vmatpush1.bf16.msra.mxu0 %v1094
    %1122 = vmatprep.subr.bf16.mxu0 %v1093
    %1123 = vmatpush1.bf16.msra.mxu0 %v1092
    %1124 = vmatprep.subr.bf16.mxu0 %v1091
    %1125 = vmatpush1.bf16.msra.mxu0 %v1090
    %1126 = vmatprep.subr.bf16.mxu0 %v1089
    %1127 = vmatpush1.bf16.msra.mxu0 %v1088
    %1128 = vmatprep.subr.bf16.mxu0 %v1087
    %1129 = vmatpush1.bf16.msra.mxu0 %v1086
    %1130 = vmatprep.subr.bf16.mxu0 %v1085
    %1131 = vmatpush1.bf16.msra.mxu0 %v1084
    %1132 = vmatprep.subr.bf16.mxu0 0
    %1133 = vmatpush2.bf16.msra.mxu0 0
    %1134 = vmatprep.subr.bf16.mxu0 0
    %1135 = vmatpush2.bf16.msra.mxu0 0
    %1136 = vmatprep.subr.bf16.mxu0 0
    %1137 = vmatpush2.bf16.msra.mxu0 0
    %1138 = vmatprep.subr.bf16.mxu0 0
    %1139 = vmatpush2.bf16.msra.mxu0 0
    %1140 = vmatprep.subr.bf16.mxu0 0
    %1141 = vmatpush2.bf16.msra.mxu0 0
    %1142 = vmatprep.subr.bf16.mxu0 0
    %1143 = vmatpush2.bf16.msra.mxu0 0
    %1144 = vmatprep.subr.bf16.mxu0 0
    %1145 = vmatpush2.bf16.msra.mxu0 0
    %1146 = vmatprep.subr.bf16.mxu0 0
    %1147 = vmatpush2.bf16.msra.mxu0 0
    %1148 = vmatprep.mubr.bf16.mxu0 0
    %1149 = vmatmul.mubr.bf16.gmra.mxu0 %v1019
    %v1150 = vpop.f32.mrf.mxu0
    %v1151 = vadd.f32 0.0, %v1150
    %v1152 = vpop.f32.mrf.mxu0
    %v1153 = vadd.f32 0.0, %v1152
    %v1154 = vpop.f32.mrf.mxu0
    %v1155 = vpop.f32.mrf.mxu0
    %1156 = vdwg.mxu0
    %v1157 = vmax.f32 %v1151, 0.0
    %v1158 = vmax.f32 %v1153, 0.0
    %v1159 = vpack.c.bf16 %v1157, %v1157
    %v1160 = vpack.c.bf16 %v1158, %v1158
    %v1161 = vld [vmem:[%s7] sm:$0xf]
    %v1162 = vld [vmem:[%s7 + $0x4] sm:$0xf]
    %v1163 = vld [vmem:[%s7 + $0x8] sm:$0xf]
    %v1164 = vld [vmem:[%s7 + $0xc] sm:$0xf]
    %v1165 = vld [vmem:[%s7 + $0x10] sm:$0xf]
    %v1166 = vld [vmem:[%s7 + $0x14] sm:$0xf]
    %v1167 = vld [vmem:[%s7 + $0x18] sm:$0xf]
    %v1168 = vld [vmem:[%s7 + $0x1c] sm:$0xf]
    %v1169 = vld [vmem:[%s7 + $0x20] sm:$0xf]
    %v1170 = vld [vmem:[%s7 + $0x24] sm:$0xf]
    %v1171 = vld [vmem:[%s7 + $0x28] sm:$0xf]
    %v1172 = vld [vmem:[%s7 + $0x2c] sm:$0xf]
    %v1173 = vld [vmem:[%s7 + $0x30] sm:$0xf]
    %v1174 = vld [vmem:[%s7 + $0x34] sm:$0xf]
    %v1175 = vld [vmem:[%s7 + $0x38] sm:$0xf]
    %v1176 = vld [vmem:[%s7 + $0x3c] sm:$0xf]
    %v1177 = vld [vmem:[%s7 + $0x40] sm:$0xf]
    %v1178 = vld [vmem:[%s7 + $0x44] sm:$0xf]
    %v1179 = vld [vmem:[%s7 + $0x48] sm:$0xf]
    %v1180 = vld [vmem:[%s7 + $0x4c] sm:$0xf]
    %v1181 = vld [vmem:[%s7 + $0x50] sm:$0xf]
    %v1182 = vld [vmem:[%s7 + $0x54] sm:$0xf]
    %v1183 = vld [vmem:[%s7 + $0x58] sm:$0xf]
    %v1184 = vld [vmem:[%s7 + $0x5c] sm:$0xf]
    %v1185 = vld [vmem:[%s7 + $0x60] sm:$0xf]
    %v1186 = vld [vmem:[%s7 + $0x64] sm:$0xf]
    %v1187 = vld [vmem:[%s7 + $0x68] sm:$0xf]
    %v1188 = vld [vmem:[%s7 + $0x6c] sm:$0xf]
    %v1189 = vld [vmem:[%s7 + $0x70] sm:$0xf]
    %v1190 = vld [vmem:[%s7 + $0x74] sm:$0xf]
    %v1191 = vld [vmem:[%s7 + $0x78] sm:$0xf]
    %v1192 = vld [vmem:[%s7 + $0x7c] sm:$0xf]
    %v1225 = vunpack.c.l.b16 %v1161
    %v1226 = vunpack.c.l.b16 %v1162
    %v1227 = vunpack.c.l.b16 %v1163
    %v1228 = vunpack.c.l.b16 %v1164
    %v1229 = vunpack.c.l.b16 %v1165
    %v1230 = vunpack.c.l.b16 %v1166
    %v1231 = vunpack.c.l.b16 %v1167
    %v1232 = vunpack.c.l.b16 %v1168
    %v1233 = vunpack.c.l.b16 %v1169
    %v1234 = vunpack.c.l.b16 %v1170
    %v1235 = vunpack.c.l.b16 %v1171
    %v1236 = vunpack.c.l.b16 %v1172
    %v1237 = vunpack.c.l.b16 %v1173
    %v1238 = vunpack.c.l.b16 %v1174
    %v1239 = vunpack.c.l.b16 %v1175
    %v1240 = vunpack.c.l.b16 %v1176
    %v1241 = vunpack.c.l.b16 %v1177
    %v1242 = vunpack.c.l.b16 %v1178
    %v1243 = vunpack.c.l.b16 %v1179
    %v1244 = vunpack.c.l.b16 %v1180
    %v1245 = vunpack.c.l.b16 %v1181
    %v1246 = vunpack.c.l.b16 %v1182
    %v1247 = vunpack.c.l.b16 %v1183
    %v1248 = vunpack.c.l.b16 %v1184
    %v1249 = vunpack.c.l.b16 %v1185
    %v1250 = vunpack.c.l.b16 %v1186
    %v1251 = vunpack.c.l.b16 %v1187
    %v1252 = vunpack.c.l.b16 %v1188
    %v1253 = vunpack.c.l.b16 %v1189
    %v1254 = vunpack.c.l.b16 %v1190
    %v1255 = vunpack.c.l.b16 %v1191
    %v1256 = vunpack.c.l.b16 %v1192
    %v1257 = vpack.c.b16 %v1226, %v1225
    %v1258 = vpack.c.b16 %v1228, %v1227
    %v1259 = vpack.c.b16 %v1230, %v1229
    %v1260 = vpack.c.b16 %v1232, %v1231
    %v1261 = vpack.c.b16 %v1234, %v1233
    %v1262 = vpack.c.b16 %v1236, %v1235
    %v1263 = vpack.c.b16 %v1238, %v1237
    %v1264 = vpack.c.b16 %v1240, %v1239
    %v1265 = vpack.c.b16 %v1242, %v1241
    %v1266 = vpack.c.b16 %v1244, %v1243
    %v1267 = vpack.c.b16 %v1246, %v1245
    %v1268 = vpack.c.b16 %v1248, %v1247
    %v1269 = vpack.c.b16 %v1250, %v1249
    %v1270 = vpack.c.b16 %v1252, %v1251
    %v1271 = vpack.c.b16 %v1254, %v1253
    %v1272 = vpack.c.b16 %v1256, %v1255
    %1289 = vmatprep.subr.bf16.mxu0 0
    %1290 = vmatpush1.bf16.msra.mxu0 %v1264
    %1291 = vmatprep.subr.bf16.mxu0 0
    %1292 = vmatpush1.bf16.msra.mxu0 %v1263
    %1293 = vmatprep.subr.bf16.mxu0 0
    %1294 = vmatpush1.bf16.msra.mxu0 %v1262
    %1295 = vmatprep.subr.bf16.mxu0 0
    %1296 = vmatpush1.bf16.msra.mxu0 %v1261
    %1297 = vmatprep.subr.bf16.mxu0 0
    %1298 = vmatpush1.bf16.msra.mxu0 %v1260
    %1299 = vmatprep.subr.bf16.mxu0 0
    %1300 = vmatpush1.bf16.msra.mxu0 %v1259
    %1301 = vmatprep.subr.bf16.mxu0 0
    %1302 = vmatpush1.bf16.msra.mxu0 %v1258
    %1303 = vmatprep.subr.bf16.mxu0 0
    %1304 = vmatpush1.bf16.msra.mxu0 %v1257
    %1305 = vmatprep.subr.bf16.mxu0 0
    %1306 = vmatpush2.bf16.msra.mxu0 %v1272
    %1307 = vmatprep.subr.bf16.mxu0 0
    %1308 = vmatpush2.bf16.msra.mxu0 %v1271
    %1309 = vmatprep.subr.bf16.mxu0 0
    %1310 = vmatpush2.bf16.msra.mxu0 %v1270
    %1311 = vmatprep.subr.bf16.mxu0 0
    %1312 = vmatpush2.bf16.msra.mxu0 %v1269
    %1313 = vmatprep.subr.bf16.mxu0 0
    %1314 = vmatpush2.bf16.msra.mxu0 %v1268
    %1315 = vmatprep.subr.bf16.mxu0 0
    %1316 = vmatpush2.bf16.msra.mxu0 %v1267
    %1317 = vmatprep.subr.bf16.mxu0 0
    %1318 = vmatpush2.bf16.msra.mxu0 %v1266
    %1319 = vmatprep.subr.bf16.mxu0 0
    %1320 = vmatpush2.bf16.msra.mxu0 %v1265
    %1321 = vmatprep.mubr.bf16.mxu0 %v1160
    %1322 = vmatmul.mubr.bf16.gmra.mxu0 %v1159
    %v1323 = vpop.f32.mrf.mxu0
    %v1324 = vadd.f32 0.0, %v1323
    %v1325 = vpop.f32.mrf.mxu0
    %v1326 = vpop.f32.mrf.mxu0
    %v1327 = vpop.f32.mrf.mxu0
    %1328 = vdwg.mxu0
    %v1329 = vadd.f32 %v1018, %v1324
    %v1330 = vpack.c.bf16 %v1329, %v1329
    %v1331 = vld [vmem:[%s8] sm:$0xff]
    %v1332 = vld [vmem:[%s8 + $0x8] sm:$0xff]
    %v1333 = vld [vmem:[%s8 + $0x10] sm:$0xff]
    %v1334 = vld [vmem:[%s8 + $0x18] sm:$0xff]
    %v1335 = vld [vmem:[%s8 + $0x20] sm:$0xff]
    %v1336 = vld [vmem:[%s8 + $0x28] sm:$0xff]
    %v1337 = vld [vmem:[%s8 + $0x30] sm:$0xff]
    %v1338 = vld [vmem:[%s8 + $0x38] sm:$0xff]
    %v1339 = vld [vmem:[%s8 + $0x40] sm:$0xff]
    %v1340 = vld [vmem:[%s8 + $0x48] sm:$0xff]
    %v1341 = vld [vmem:[%s8 + $0x50] sm:$0xff]
    %v1342 = vld [vmem:[%s8 + $0x58] sm:$0xff]
    %v1343 = vld [vmem:[%s8 + $0x60] sm:$0xff]
    %v1344 = vld [vmem:[%s8 + $0x68] sm:$0xff]
    %v1345 = vld [vmem:[%s8 + $0x70] sm:$0xff]
    %v1346 = vld [vmem:[%s8 + $0x78] sm:$0xff]
    %v1363 = vunpack.c.l.b16 %v1331
    %v1364 = vunpack.c.h.b16 %v1331
    %v1365 = vunpack.c.l.b16 %v1332
    %v1366 = vunpack.c.h.b16 %v1332
    %v1367 = vunpack.c.l.b16 %v1333
    %v1368 = vunpack.c.h.b16 %v1333
    %v1369 = vunpack.c.l.b16 %v1334
    %v1370 = vunpack.c.h.b16 %v1334
    %v1371 = vunpack.c.l.b16 %v1335
    %v1372 = vunpack.c.h.b16 %v1335
    %v1373 = vunpack.c.l.b16 %v1336
    %v1374 = vunpack.c.h.b16 %v1336
    %v1375 = vunpack.c.l.b16 %v1337
    %v1376 = vunpack.c.h.b16 %v1337
    %v1377 = vunpack.c.l.b16 %v1338
    %v1378 = vunpack.c.h.b16 %v1338
    %v1379 = vunpack.c.l.b16 %v1339
    %v1380 = vunpack.c.h.b16 %v1339
    %v1381 = vunpack.c.l.b16 %v1340
    %v1382 = vunpack.c.h.b16 %v1340
    %v1383 = vunpack.c.l.b16 %v1341
    %v1384 = vunpack.c.h.b16 %v1341
    %v1385 = vunpack.c.l.b16 %v1342
    %v1386 = vunpack.c.h.b16 %v1342
    %v1387 = vunpack.c.l.b16 %v1343
    %v1388 = vunpack.c.h.b16 %v1343
    %v1389 = vunpack.c.l.b16 %v1344
    %v1390 = vunpack.c.h.b16 %v1344
    %v1391 = vunpack.c.l.b16 %v1345
    %v1392 = vunpack.c.h.b16 %v1345
    %v1393 = vunpack.c.l.b16 %v1346
    %v1394 = vunpack.c.h.b16 %v1346
    %v1395 = vpack.c.b16 %v1365, %v1363
    %v1396 = vpack.c.b16 %v1366, %v1364
    %v1397 = vpack.c.b16 %v1369, %v1367
    %v1398 = vpack.c.b16 %v1370, %v1368
    %v1399 = vpack.c.b16 %v1373, %v1371
    %v1400 = vpack.c.b16 %v1374, %v1372
    %v1401 = vpack.c.b16 %v1377, %v1375
    %v1402 = vpack.c.b16 %v1378, %v1376
    %v1403 = vpack.c.b16 %v1381, %v1379
    %v1404 = vpack.c.b16 %v1382, %v1380
    %v1405 = vpack.c.b16 %v1385, %v1383
    %v1406 = vpack.c.b16 %v1386, %v1384
    %v1407 = vpack.c.b16 %v1389, %v1387
    %v1408 = vpack.c.b16 %v1390, %v1388
    %v1409 = vpack.c.b16 %v1393, %v1391
    %v1410 = vpack.c.b16 %v1394, %v1392
    %1427 = vmatprep.subr.bf16.mxu0 %v1410
    %1428 = vmatpush1.bf16.msra.mxu0 %v1409
    %1429 = vmatprep.subr.bf16.mxu0 %v1408
    %1430 = vmatpush1.bf16.msra.mxu0 %v1407
    %1431 = vmatprep.subr.bf16.mxu0 %v1406
    %1432 = vmatpush1.bf16.msra.mxu0 %v1405
    %1433 = vmatprep.subr.bf16.mxu0 %v1404
    %1434 = vmatpush1.bf16.msra.mxu0 %v1403
    %1435 = vmatprep.subr.bf16.mxu0 %v1402
    %1436 = vmatpush1.bf16.msra.mxu0 %v1401
    %1437 = vmatprep.subr.bf16.mxu0 %v1400
    %1438 = vmatpush1.bf16.msra.mxu0 %v1399
    %1439 = vmatprep.subr.bf16.mxu0 %v1398
    %1440 = vmatpush1.bf16.msra.mxu0 %v1397
    %1441 = vmatprep.subr.bf16.mxu0 %v1396
    %1442 = vmatpush1.bf16.msra.mxu0 %v1395
    %1443 = vmatprep.subr.bf16.mxu0 0
    %1444 = vmatpush2.bf16.msra.mxu0 0
    %1445 = vmatprep.subr.bf16.mxu0 0
    %1446 = vmatpush2.bf16.msra.mxu0 0
    %1447 = vmatprep.subr.bf16.mxu0 0
    %1448 = vmatpush2.bf16.msra.mxu0 0
    %1449 = vmatprep.subr.bf16.mxu0 0
    %1450 = vmatpush2.bf16.msra.mxu0 0
    %1451 = vmatprep.subr.bf16.mxu0 0
    %1452 = vmatpush2.bf16.msra.mxu0 0
    %1453 = vmatprep.subr.bf16.mxu0 0
    %1454 = vmatpush2.bf16.msra.mxu0 0
    %1455 = vmatprep.subr.bf16.mxu0 0
    %1456 = vmatpush2.bf16.msra.mxu0 0
    %1457 = vmatprep.subr.bf16.mxu0 0
    %1458 = vmatpush2.bf16.msra.mxu0 0
    %1459 = vmatprep.mubr.bf16.mxu0 0
    %1460 = vmatmul.mubr.bf16.gmra.mxu0 %v1330
    %v1461 = vpop.f32.mrf.mxu0
    %v1462 = vadd.f32 0.0, %v1461
    %v1463 = vpop.f32.mrf.mxu0
    %v1464 = vadd.f32 0.0, %v1463
    %v1465 = vpop.f32.mrf.mxu0
    %v1466 = vpop.f32.mrf.mxu0
    %1467 = vdwg.mxu0
    %vm1468 = vcmask 1041408
    %v1469 = vsel %vm1468, %v1462, -inf
    %v1470 = vsel %vm1468, %v1464, -inf
    %v1471 = vmax.f32 %v1469, %v1470
    %1472 = vmax.xlane.f32.xlu0 %v1471
    %v1473 = vpop.xlane.xlu0 %1472
    %vm1474 = vcmp.ge.f32.partialorder %v1462, %v1473
    %vm1475 = vcmp.ge.f32.partialorder %v1464, %v1473
    %v1476 = vcvt.s32.f32 %v283
    %v1477 = vcvt.s32.f32 %v284
    %v1478 = vsel %vm1474, %v1476, 256.0
    %v1479 = vsel %vm1475, %v1477, 256.0
    %v1480 = vsel %vm1468, %v1478, inf
    %v1481 = vsel %vm1468, %v1479, inf
    %v1482 = vmin.f32 %v1480, %v1481
    %1483 = vmin.xlane.f32.xlu0 %v1482
    %v1484 = vpop.xlane.xlu0 %1483
    %v1485 = vcvt.f32.s32.to.zero.pseudo %v1484
    %v1486 = vstv %s286
    %vm1487 = vcmp.eq.s32.totalorder %v283, %v1486
    %v1488 = vld [vmem:[%s9] sm:$0x3]
    %v1489 = vsel %vm1487, %v1485, %v1488
    %1490 = vst [vmem:[%s9] sm:$0x3] %v1489
    %vm1491 = vcmp.eq.s32.totalorder %v283, %v1485
    %vm1492 = vcmp.eq.s32.totalorder %v284, %v1485
    %v1493 = vsel %vm1491, 1, 0
    %v1494 = vsel %vm1492, 1, 0
    %v1495 = vcvt.s32.f32 %v1493
    %v1496 = vcvt.s32.f32 %v1494
    %v1497 = vpack.c.bf16 %v1495, %v1495
    %v1498 = vpack.c.bf16 %v1496, %v1496
    %v1499 = vld [vmem:[%s3] sm:$0xf]
    %v1500 = vld [vmem:[%s3 + $0x4] sm:$0xf]
    %v1501 = vld [vmem:[%s3 + $0x8] sm:$0xf]
    %v1502 = vld [vmem:[%s3 + $0xc] sm:$0xf]
    %v1503 = vld [vmem:[%s3 + $0x10] sm:$0xf]
    %v1504 = vld [vmem:[%s3 + $0x14] sm:$0xf]
    %v1505 = vld [vmem:[%s3 + $0x18] sm:$0xf]
    %v1506 = vld [vmem:[%s3 + $0x1c] sm:$0xf]
    %v1507 = vld [vmem:[%s3 + $0x20] sm:$0xf]
    %v1508 = vld [vmem:[%s3 + $0x24] sm:$0xf]
    %v1509 = vld [vmem:[%s3 + $0x28] sm:$0xf]
    %v1510 = vld [vmem:[%s3 + $0x2c] sm:$0xf]
    %v1511 = vld [vmem:[%s3 + $0x30] sm:$0xf]
    %v1512 = vld [vmem:[%s3 + $0x34] sm:$0xf]
    %v1513 = vld [vmem:[%s3 + $0x38] sm:$0xf]
    %v1514 = vld [vmem:[%s3 + $0x3c] sm:$0xf]
    %v1515 = vld [vmem:[%s3 + $0x40] sm:$0xf]
    %v1516 = vld [vmem:[%s3 + $0x44] sm:$0xf]
    %v1517 = vld [vmem:[%s3 + $0x48] sm:$0xf]
    %v1518 = vld [vmem:[%s3 + $0x4c] sm:$0xf]
    %v1519 = vld [vmem:[%s3 + $0x50] sm:$0xf]
    %v1520 = vld [vmem:[%s3 + $0x54] sm:$0xf]
    %v1521 = vld [vmem:[%s3 + $0x58] sm:$0xf]
    %v1522 = vld [vmem:[%s3 + $0x5c] sm:$0xf]
    %v1523 = vld [vmem:[%s3 + $0x60] sm:$0xf]
    %v1524 = vld [vmem:[%s3 + $0x64] sm:$0xf]
    %v1525 = vld [vmem:[%s3 + $0x68] sm:$0xf]
    %v1526 = vld [vmem:[%s3 + $0x6c] sm:$0xf]
    %v1527 = vld [vmem:[%s3 + $0x70] sm:$0xf]
    %v1528 = vld [vmem:[%s3 + $0x74] sm:$0xf]
    %v1529 = vld [vmem:[%s3 + $0x78] sm:$0xf]
    %v1530 = vld [vmem:[%s3 + $0x7c] sm:$0xf]
    %v1563 = vunpack.c.l.b16 %v1499
    %v1564 = vunpack.c.l.b16 %v1500
    %v1565 = vunpack.c.l.b16 %v1501
    %v1566 = vunpack.c.l.b16 %v1502
    %v1567 = vunpack.c.l.b16 %v1503
    %v1568 = vunpack.c.l.b16 %v1504
    %v1569 = vunpack.c.l.b16 %v1505
    %v1570 = vunpack.c.l.b16 %v1506
    %v1571 = vunpack.c.l.b16 %v1507
    %v1572 = vunpack.c.l.b16 %v1508
    %v1573 = vunpack.c.l.b16 %v1509
    %v1574 = vunpack.c.l.b16 %v1510
    %v1575 = vunpack.c.l.b16 %v1511
    %v1576 = vunpack.c.l.b16 %v1512
    %v1577 = vunpack.c.l.b16 %v1513
    %v1578 = vunpack.c.l.b16 %v1514
    %v1579 = vunpack.c.l.b16 %v1515
    %v1580 = vunpack.c.l.b16 %v1516
    %v1581 = vunpack.c.l.b16 %v1517
    %v1582 = vunpack.c.l.b16 %v1518
    %v1583 = vunpack.c.l.b16 %v1519
    %v1584 = vunpack.c.l.b16 %v1520
    %v1585 = vunpack.c.l.b16 %v1521
    %v1586 = vunpack.c.l.b16 %v1522
    %v1587 = vunpack.c.l.b16 %v1523
    %v1588 = vunpack.c.l.b16 %v1524
    %v1589 = vunpack.c.l.b16 %v1525
    %v1590 = vunpack.c.l.b16 %v1526
    %v1591 = vunpack.c.l.b16 %v1527
    %v1592 = vunpack.c.l.b16 %v1528
    %v1593 = vunpack.c.l.b16 %v1529
    %v1594 = vunpack.c.l.b16 %v1530
    %v1595 = vpack.c.b16 %v1564, %v1563
    %v1596 = vpack.c.b16 %v1566, %v1565
    %v1597 = vpack.c.b16 %v1568, %v1567
    %v1598 = vpack.c.b16 %v1570, %v1569
    %v1599 = vpack.c.b16 %v1572, %v1571
    %v1600 = vpack.c.b16 %v1574, %v1573
    %v1601 = vpack.c.b16 %v1576, %v1575
    %v1602 = vpack.c.b16 %v1578, %v1577
    %v1603 = vpack.c.b16 %v1580, %v1579
    %v1604 = vpack.c.b16 %v1582, %v1581
    %v1605 = vpack.c.b16 %v1584, %v1583
    %v1606 = vpack.c.b16 %v1586, %v1585
    %v1607 = vpack.c.b16 %v1588, %v1587
    %v1608 = vpack.c.b16 %v1590, %v1589
    %v1609 = vpack.c.b16 %v1592, %v1591
    %v1610 = vpack.c.b16 %v1594, %v1593
    %1627 = vmatprep.subr.bf16.mxu0 0
    %1628 = vmatpush1.bf16.msra.mxu0 %v1602
    %1629 = vmatprep.subr.bf16.mxu0 0
    %1630 = vmatpush1.bf16.msra.mxu0 %v1601
    %1631 = vmatprep.subr.bf16.mxu0 0
    %1632 = vmatpush1.bf16.msra.mxu0 %v1600
    %1633 = vmatprep.subr.bf16.mxu0 0
    %1634 = vmatpush1.bf16.msra.mxu0 %v1599
    %1635 = vmatprep.subr.bf16.mxu0 0
    %1636 = vmatpush1.bf16.msra.mxu0 %v1598
    %1637 = vmatprep.subr.bf16.mxu0 0
    %1638 = vmatpush1.bf16.msra.mxu0 %v1597
    %1639 = vmatprep.subr.bf16.mxu0 0
    %1640 = vmatpush1.bf16.msra.mxu0 %v1596
    %1641 = vmatprep.subr.bf16.mxu0 0
    %1642 = vmatpush1.bf16.msra.mxu0 %v1595
    %1643 = vmatprep.subr.bf16.mxu0 0
    %1644 = vmatpush2.bf16.msra.mxu0 %v1610
    %1645 = vmatprep.subr.bf16.mxu0 0
    %1646 = vmatpush2.bf16.msra.mxu0 %v1609
    %1647 = vmatprep.subr.bf16.mxu0 0
    %1648 = vmatpush2.bf16.msra.mxu0 %v1608
    %1649 = vmatprep.subr.bf16.mxu0 0
    %1650 = vmatpush2.bf16.msra.mxu0 %v1607
    %1651 = vmatprep.subr.bf16.mxu0 0
    %1652 = vmatpush2.bf16.msra.mxu0 %v1606
    %1653 = vmatprep.subr.bf16.mxu0 0
    %1654 = vmatpush2.bf16.msra.mxu0 %v1605
    %1655 = vmatprep.subr.bf16.mxu0 0
    %1656 = vmatpush2.bf16.msra.mxu0 %v1604
    %1657 = vmatprep.subr.bf16.mxu0 0
    %1658 = vmatpush2.bf16.msra.mxu0 %v1603
    %1659 = vmatprep.mubr.bf16.mxu0 %v1498
    %1660 = vmatmul.mubr.bf16.gmra.mxu0 %v1497
    %v1661 = vpop.f32.mrf.mxu0
    %v1662 = vadd.f32 0.0, %v1661
    %v1663 = vpop.f32.mrf.mxu0
    %v1664 = vpop.f32.mrf.mxu0
    %v1665 = vpop.f32.mrf.mxu0
    %1666 = vdwg.mxu0
    %1667 = vst [vmem:[#allocation4] sm:$0x3] %v1662
  $region42: #{quantized_model_forward.1} parent=0 // loop_footer
    %s290 = sadd.s32 1, %s286
  $region43: #{quantized_model_forward.1} parent=0 // loop_footer_branch
    %285 = sbr.rel target = $region39
  $region44: #{quantized_model_forward.1} parent=0 // loop_exit
    _
  // Predicated region
  $region45: #{quantized_model_forward.1} parent=0 // pred_check
    _
  $region46: #{quantized_model_forward.1} parent=0 // pred_check_branch
    %1669 = sbr.rel (0) target = $region48
  $region47: #{quantized_model_forward.1} parent=0 // pred_region
    _
  $region48: #{quantized_model_forward.1} parent=0 // pred_fallthru
    _
  // Predicated region
  $region49: #{quantized_model_forward.1} parent=0 // pred_check
    _
  $region50: #{quantized_model_forward.1} parent=0 // pred_check_branch
    %1671 = sbr.rel (0) target = $region52
  $region51: #{quantized_model_forward.1} parent=0 // pred_region
    _
  $region52: #{quantized_model_forward.1} parent=0 // pred_fallthru
    _

</llo_original>
